<compile_context>
chip_gen: v7x
topology: tpu7x:2x2x1
jax: 0.10.0
libtpu: 0.0.40
codegen_flags: <defaults>
</compile_context>

<pallas_src>
import jax
import jax.numpy as jnp
from jax import lax
from jax.experimental import pallas as pl
from jax.experimental.pallas import tpu as pltpu

LANES = 128
NUM_REJ = 0 + 1                 # Net(num_rej=0) -> self.num_rej = 1
N_CLASSES = 10 + NUM_REJ        # fc3 output = 11 logits


# ----------------------------------------------------------------------------
# Pallas kernels
# ----------------------------------------------------------------------------
def _mm_bias_relu_kernel(x_ref, w_ref, b_ref, o_ref):
    # (TM, K) @ (K, 128) on the MXU, f32 accumulation, bias + ReLU epilogue.
    acc = jnp.dot(x_ref[...], w_ref[...], preferred_element_type=jnp.float32)
    acc = acc + b_ref[...]
    o_ref[...] = jnp.maximum(acc, 0.0).astype(o_ref.dtype)


def _pick_tile_m(m, target=512):
    """Largest divisor of m that is a multiple of 32 and <= target (else m)."""
    if m <= target:
        return m
    for t in range(target, 31, -32):
        if m % t == 0:
            return t
    return m


def conv_matmul(patches, w, b):
    """patches: (M, K) bf16, w: (K, 128) bf16, b: (1, 128) f32 -> (M, 128) bf16.

    Lane-dense output (Cout padded to 128), M-tiled grid so v7x can shard the
    row blocks across both TensorCores.
    """
    M, K = patches.shape
    Kw, Np = w.shape
    assert K == Kw and Np == LANES
    tm = _pick_tile_m(M)
    return pl.pallas_call(
        _mm_bias_relu_kernel,
        out_shape=jax.ShapeDtypeStruct((M, Np), jnp.bfloat16),
        grid=(M // tm,),
        in_specs=[
            pl.BlockSpec((tm, K), lambda i: (i, 0)),
            pl.BlockSpec((K, Np), lambda i: (0, 0)),   # weights stay resident
            pl.BlockSpec((1, Np), lambda i: (0, 0)),
        ],
        out_specs=pl.BlockSpec((tm, Np), lambda i: (i, 0)),
        compiler_params=pltpu.CompilerParams(
            dimension_semantics=("parallel",),
            vmem_limit_bytes=32 * 1024 * 1024,
        ),
    )(patches, w, b)


def _fc_tail_kernel(x_ref, w1_ref, b1_ref, w2_ref, b2_ref, w3_ref, b3_ref,
                    o_ref):
    # Fused fc1 -> fc2 -> fc3: activations never leave VMEM/vregs.
    a = jnp.dot(x_ref[...], w1_ref[...], preferred_element_type=jnp.float32)
    a = jnp.maximum(a + b1_ref[...], 0.0).astype(jnp.bfloat16)
    a = jnp.dot(a, w2_ref[...], preferred_element_type=jnp.float32)
    a = jnp.maximum(a + b2_ref[...], 0.0).astype(jnp.bfloat16)
    a = jnp.dot(a, w3_ref[...], preferred_element_type=jnp.float32)
    o_ref[...] = (a + b3_ref[...]).astype(o_ref.dtype)


def fc_tail(flat, w1, b1, w2, b2, w3, b3):
    M, K = flat.shape

    def full(shape):
        return pl.BlockSpec(shape, lambda i: (0, 0))

    return pl.pallas_call(
        _fc_tail_kernel,
        out_shape=jax.ShapeDtypeStruct((M, LANES), jnp.float32),
        grid=(1,),
        in_specs=[
            full((M, K)),
            full(w1.shape), full(b1.shape),
            full(w2.shape), full(b2.shape),
            full(w3.shape), full(b3.shape),
        ],
        out_specs=full((M, LANES)),
        compiler_params=pltpu.CompilerParams(
            dimension_semantics=("arbitrary",),
            vmem_limit_bytes=32 * 1024 * 1024,
        ),
    )(flat, w1, b1, w2, b2, w3, b3)


# ----------------------------------------------------------------------------
# XLA glue (single fused ops; no Python-loop im2col, no standalone pool kernel)
# ----------------------------------------------------------------------------
def im2col_patches(x_nhwc, k):
    """One fused op; feature dim ordered (C, kh, kw) channel-major, matching
    torch's weight.reshape(Cout, -1)."""
    p = lax.conv_general_dilated_patches(
        x_nhwc, (k, k), (1, 1), "VALID",
        dimension_numbers=("NHWC", "HWIO", "NHWC"))
    n, ho, wo, f = p.shape
    return p.reshape(n * ho * wo, f), (n, ho, wo)


def maxpool2x2_nhwc(x):
    n, h, w, c = x.shape
    assert h % 2 == 0 and w % 2 == 0, "maxpool2x2 requires even spatial dims"
    return x.reshape(n, h // 2, 2, w // 2, 2, c).max(axis=(2, 4))


# ----------------------------------------------------------------------------
# Parameters: PyTorch-style init, then one-time packing into TPU layouts
# ----------------------------------------------------------------------------
def init_params(key):
    ks = jax.random.split(key, 10)

    def u(k, shape, fan_in):
        bound = 1.0 / (fan_in ** 0.5)
        return jax.random.uniform(k, shape, jnp.float32, -bound, bound)

    return {
        "conv1_w": u(ks[0], (6, 3, 5, 5), 3 * 25),
        "conv1_b": u(ks[1], (6,), 3 * 25),
        "conv2_w": u(ks[2], (16, 6, 5, 5), 6 * 25),
        "conv2_b": u(ks[3], (16,), 6 * 25),
        "fc1_w": u(ks[4], (120, 400), 400),
        "fc1_b": u(ks[5], (120,), 400),
        "fc2_w": u(ks[6], (84, 120), 120),
        "fc2_b": u(ks[7], (84,), 120),
        "fc3_w": u(ks[8], (N_CLASSES, 84), 84),
        "fc3_b": u(ks[9], (N_CLASSES,), 84),
    }


def _pad_cols(a, n):
    return jnp.pad(a, ((0, 0), (0, n - a.shape[1])))


def _pad_bias(v, n):
    return jnp.pad(v, (0, n - v.shape[0])).reshape(1, n).astype(jnp.float32)


def pack_params(params):
    """Pack once: (K, 128) lane-dense bf16 weight matrices + f32 (1,128) biases.
    Padded output channels are exactly zero, so ReLU keeps them zero and the
    padded rows of the next weight matrix ignore them."""
    w1 = _pad_cols(params["conv1_w"].reshape(6, -1).T, LANES)        # (75, 128)
    w2 = _pad_cols(params["conv2_w"].reshape(16, -1).T, LANES)       # (150, 128)
    # fc1 columns in torch order are (c, y, x); our flatten is (y, x, c):
    # fold that permutation into the weights (zero runtime cost).
    fc1 = params["fc1_w"].reshape(120, 16, 5, 5).transpose(0, 2, 3, 1)
    fc1 = _pad_cols(fc1.reshape(120, 400).T, LANES)                  # (400, 128)
    fc2 = jnp.pad(params["fc2_w"].T, ((0, 8), (0, 44)))              # (128, 128)
    fc3 = jnp.pad(params["fc3_w"].T, ((0, 44), (0, LANES - N_CLASSES)))
    bf = jnp.bfloat16
    return {
        "w1": w1.astype(bf), "b1": _pad_bias(params["conv1_b"], LANES),
        "w2": w2.astype(bf), "b2": _pad_bias(params["conv2_b"], LANES),
        "fc1_w": fc1.astype(bf), "fc1_b": _pad_bias(params["fc1_b"], LANES),
        "fc2_w": fc2.astype(bf), "fc2_b": _pad_bias(params["fc2_b"], LANES),
        "fc3_w": fc3.astype(bf), "fc3_b": _pad_bias(params["fc3_b"], LANES),
    }


# ----------------------------------------------------------------------------
# Forward pass (mirrors Net.forward)
# ----------------------------------------------------------------------------
def net_forward(x, packed):
    n = x.shape[0]
    # One tiny NCHW -> NHWC transpose on the input; activations stay
    # channels-last from here on (no intermediate transposes).
    h = jnp.transpose(x, (0, 2, 3, 1)).astype(jnp.bfloat16)          # (N,32,32,3)

    # conv1 (3->6, k=5) + bias + ReLU (Pallas), then 2x2 max-pool (XLA-fused).
    p, (_, ho, wo) = im2col_patches(h, 5)                            # (N*784, 75)
    h = conv_matmul(p, packed["w1"], packed["b1"])                   # (N*784, 128)
    h = h.reshape(n, ho, wo, LANES)[..., :6]                         # (N,28,28,6)
    h = maxpool2x2_nhwc(h)                                           # (N,14,14,6)

    # conv2 (6->16, k=5) + bias + ReLU (Pallas), then 2x2 max-pool.
    p, (_, ho, wo) = im2col_patches(h, 5)                            # (N*100, 150)
    h = conv_matmul(p, packed["w2"], packed["b2"])                   # (N*100, 128)
    h = h.reshape(n, ho, wo, LANES)[..., :16]                        # (N,10,10,16)
    h = maxpool2x2_nhwc(h)                                           # (N,5,5,16)

    # Channels-last flatten (fc1 weights were permuted to match torch order),
    # then the fully fused fc1 -> fc2 -> fc3 tail in ONE Pallas kernel.
    flat = h.reshape(n, 16 * 5 * 5)                                  # (N, 400)
    logits = fc_tail(flat, packed["fc1_w"], packed["fc1_b"],
                     packed["fc2_w"], packed["fc2_b"],
                     packed["fc3_w"], packed["fc3_b"])               # (N, 128)

    h = logits[:, :N_CLASSES]        # drop the lane padding before slicing
    h1 = h[:, :-NUM_REJ]
    h2 = h[:, -NUM_REJ:]
    return h, h1, h2
    # TODO(synk): Net.loss / Net.pconf are training-time loss helpers, not part
    # of the forward pass, so they are not implemented here.


# ----------------------------------------------------------------------------
if __name__ == "__main__":
    key = jax.random.PRNGKey(0)
    pkey, xkey = jax.random.split(key)
    params = init_params(pkey)
    packed = pack_params(params)     # one-time packing, outside jit

    # Input must be (N, 3, 32, 32) so the flatten hits 16*5*5 = 400.
    x = jax.random.normal(xkey, (2, 3, 32, 32), dtype=jnp.float32)

    fwd = jax.jit(net_forward)
    h, h1, h2 = fwd(x, packed)
    jax.block_until_ready((h, h1, h2))

    assert h.shape == (2, N_CLASSES)
    assert h1.shape == (2, 10)
    assert h2.shape == (2, NUM_REJ)
    print("KERNEL_OK")
</pallas_src>

<mosaic_0001>
module attributes {stable_mosaic.version = 11 : i64} {
  func.func @_mm_bias_relu_kernel(%arg0: i32, %arg1: memref<224x75xbf16, #tpu.memory_space<vmem>>, %arg2: memref<75x128xbf16, #tpu.memory_space<vmem>>, %arg3: memref<1x128xf32, #tpu.memory_space<vmem>>, %arg4: memref<224x128xbf16, #tpu.memory_space<vmem>>) attributes {dimension_semantics = [#tpu.dimension_semantics<parallel>], iteration_bounds = array<i64: 7>, scalar_prefetch = 0 : i64, scratch_operands = 0 : i64, tpu.core_type = #tpu.core_type<tc>, window_params = [{transform_indices = @transform_0, window_bounds = array<i64: 224, 75>}, {pipeline_mode = #tpu.pipeline_mode<synchronous>, transform_indices = @transform_1, window_bounds = array<i64: 75, 128>}, {pipeline_mode = #tpu.pipeline_mode<synchronous>, transform_indices = @transform_2, window_bounds = array<i64: 1, 128>}, {transform_indices = @transform_3, window_bounds = array<i64: 224, 128>}]} {
    %c0 = arith.constant 0 : index
    %c0_0 = arith.constant 0 : index
    %0 = vector.load %arg1[%c0, %c0_0] : memref<224x75xbf16, #tpu.memory_space<vmem>>, vector<224x75xbf16>
    %c0_1 = arith.constant 0 : index
    %c0_2 = arith.constant 0 : index
    %1 = vector.load %arg2[%c0_1, %c0_2] : memref<75x128xbf16, #tpu.memory_space<vmem>>, vector<75x128xbf16>
    %cst = arith.constant dense<0.000000e+00> : vector<224x128xf32>
    %2 = tpu.matmul %0, %1, %cst {dimension_numbers = #tpu.dot_dimension_numbers<[1], [0], [0], [1], [0, 0, 1, 1], [], []>} : vector<224x75xbf16>, vector<75x128xbf16>, vector<224x128xf32> -> vector<224x128xf32>
    %c0_3 = arith.constant 0 : index
    %c0_4 = arith.constant 0 : index
    %3 = vector.load %arg3[%c0_3, %c0_4] : memref<1x128xf32, #tpu.memory_space<vmem>>, vector<1x128xf32>
    %4 = vector.broadcast %3 : vector<1x128xf32> to vector<224x128xf32>
    %5 = arith.addf %2, %4 : vector<224x128xf32>
    %cst_5 = arith.constant 0.000000e+00 : f32
    %6 = vector.broadcast %cst_5 : f32 to vector<224x128xf32>
    %7 = arith.maximumf %5, %6 : vector<224x128xf32>
    %8 = arith.truncf %7 : vector<224x128xf32> to vector<224x128xbf16>
    %c0_6 = arith.constant 0 : index
    %c0_7 = arith.constant 0 : index
    %9 = vector.load %arg4[%c0_6, %c0_7] : memref<224x128xbf16, #tpu.memory_space<vmem>>, vector<224x128xbf16>
    tpu.vector_store %arg4[%c0_6, %c0_7], %8 {strides = array<i32>} : memref<224x128xbf16, #tpu.memory_space<vmem>>, vector<224x128xbf16>,
    return
  }
  func.func @transform_0(%arg0: i32) -> (i32, i32) {
    %c0_i32 = arith.constant 0 : i32
    %c0_i32_0 = arith.constant 0 : i32
    return %arg0, %c0_i32 : i32, i32
  }
  func.func @transform_1(%arg0: i32) -> (i32, i32) {
    %c0_i32 = arith.constant 0 : i32
    %c0_i32_0 = arith.constant 0 : i32
    %c0_i32_1 = arith.constant 0 : i32
    return %c0_i32, %c0_i32_0 : i32, i32
  }
  func.func @transform_2(%arg0: i32) -> (i32, i32) {
    %c0_i32 = arith.constant 0 : i32
    %c0_i32_0 = arith.constant 0 : i32
    %c0_i32_1 = arith.constant 0 : i32
    return %c0_i32, %c0_i32_0 : i32, i32
  }
  func.func @transform_3(%arg0: i32) -> (i32, i32) {
    %c0_i32 = arith.constant 0 : i32
    %c0_i32_0 = arith.constant 0 : i32
    return %arg0, %c0_i32 : i32, i32
  }
}

module attributes {stable_mosaic.version = 11 : i64} {
  func.func @_mm_bias_relu_kernel(%arg0: i32, %arg1: memref<200x150xbf16, #tpu.memory_space<vmem>>, %arg2: memref<150x128xbf16, #tpu.memory_space<vmem>>, %arg3: memref<1x128xf32, #tpu.memory_space<vmem>>, %arg4: memref<200x128xbf16, #tpu.memory_space<vmem>>) attributes {dimension_semantics = [#tpu.dimension_semantics<parallel>], iteration_bounds = array<i64: 1>, scalar_prefetch = 0 : i64, scratch_operands = 0 : i64, tpu.core_type = #tpu.core_type<tc>, window_params = [{transform_indices = @transform_0, window_bounds = array<i64: 200, 150>}, {pipeline_mode = #tpu.pipeline_mode<synchronous>, transform_indices = @transform_1, window_bounds = array<i64: 150, 128>}, {pipeline_mode = #tpu.pipeline_mode<synchronous>, transform_indices = @transform_2, window_bounds = array<i64: 1, 128>}, {transform_indices = @transform_3, window_bounds = array<i64: 200, 128>}]} {
    %c0 = arith.constant 0 : index
    %c0_0 = arith.constant 0 : index
    %0 = vector.load %arg1[%c0, %c0_0] : memref<200x150xbf16, #tpu.memory_space<vmem>>, vector<200x150xbf16>
    %c0_1 = arith.constant 0 : index
    %c0_2 = arith.constant 0 : index
    %1 = vector.load %arg2[%c0_1, %c0_2] : memref<150x128xbf16, #tpu.memory_space<vmem>>, vector<150x128xbf16>
    %cst = arith.constant dense<0.000000e+00> : vector<200x128xf32>
    %2 = tpu.matmul %0, %1, %cst {dimension_numbers = #tpu.dot_dimension_numbers<[1], [0], [0], [1], [0, 0, 1, 1], [], []>} : vector<200x150xbf16>, vector<150x128xbf16>, vector<200x128xf32> -> vector<200x128xf32>
    %c0_3 = arith.constant 0 : index
    %c0_4 = arith.constant 0 : index
    %3 = vector.load %arg3[%c0_3, %c0_4] : memref<1x128xf32, #tpu.memory_space<vmem>>, vector<1x128xf32>
    %4 = vector.broadcast %3 : vector<1x128xf32> to vector<200x128xf32>
    %5 = arith.addf %2, %4 : vector<200x128xf32>
    %cst_5 = arith.constant 0.000000e+00 : f32
    %6 = vector.broadcast %cst_5 : f32 to vector<200x128xf32>
    %7 = arith.maximumf %5, %6 : vector<200x128xf32>
    %8 = arith.truncf %7 : vector<200x128xf32> to vector<200x128xbf16>
    %c0_6 = arith.constant 0 : index
    %c0_7 = arith.constant 0 : index
    %9 = vector.load %arg4[%c0_6, %c0_7] : memref<200x128xbf16, #tpu.memory_space<vmem>>, vector<200x128xbf16>
    tpu.vector_store %arg4[%c0_6, %c0_7], %8 {strides = array<i32>} : memref<200x128xbf16, #tpu.memory_space<vmem>>, vector<200x128xbf16>,
    return
  }
  func.func @transform_0(%arg0: i32) -> (i32, i32) {
    %c0_i32 = arith.constant 0 : i32
    %c0_i32_0 = arith.constant 0 : i32
    return %arg0, %c0_i32 : i32, i32
  }
  func.func @transform_1(%arg0: i32) -> (i32, i32) {
    %c0_i32 = arith.constant 0 : i32
    %c0_i32_0 = arith.constant 0 : i32
    %c0_i32_1 = arith.constant 0 : i32
    return %c0_i32, %c0_i32_0 : i32, i32
  }
  func.func @transform_2(%arg0: i32) -> (i32, i32) {
    %c0_i32 = arith.constant 0 : i32
    %c0_i32_0 = arith.constant 0 : i32
    %c0_i32_1 = arith.constant 0 : i32
    return %c0_i32, %c0_i32_0 : i32, i32
  }
  func.func @transform_3(%arg0: i32) -> (i32, i32) {
    %c0_i32 = arith.constant 0 : i32
    %c0_i32_0 = arith.constant 0 : i32
    return %arg0, %c0_i32 : i32, i32
  }
}

module attributes {stable_mosaic.version = 11 : i64} {
  func.func @_fc_tail_kernel(%arg0: i32, %arg1: memref<2x400xbf16, #tpu.memory_space<vmem>>, %arg2: memref<400x128xbf16, #tpu.memory_space<vmem>>, %arg3: memref<1x128xf32, #tpu.memory_space<vmem>>, %arg4: memref<128x128xbf16, #tpu.memory_space<vmem>>, %arg5: memref<1x128xf32, #tpu.memory_space<vmem>>, %arg6: memref<128x128xbf16, #tpu.memory_space<vmem>>, %arg7: memref<1x128xf32, #tpu.memory_space<vmem>>, %arg8: memref<2x128xf32, #tpu.memory_space<vmem>>) attributes {dimension_semantics = [#tpu.dimension_semantics<arbitrary>], iteration_bounds = array<i64: 1>, scalar_prefetch = 0 : i64, scratch_operands = 0 : i64, tpu.core_type = #tpu.core_type<tc>, window_params = [{pipeline_mode = #tpu.pipeline_mode<synchronous>, transform_indices = @transform_0, window_bounds = array<i64: 2, 400>}, {pipeline_mode = #tpu.pipeline_mode<synchronous>, transform_indices = @transform_1, window_bounds = array<i64: 400, 128>}, {pipeline_mode = #tpu.pipeline_mode<synchronous>, transform_indices = @transform_2, window_bounds = array<i64: 1, 128>}, {pipeline_mode = #tpu.pipeline_mode<synchronous>, transform_indices = @transform_3, window_bounds = array<i64: 128, 128>}, {pipeline_mode = #tpu.pipeline_mode<synchronous>, transform_indices = @transform_4, window_bounds = array<i64: 1, 128>}, {pipeline_mode = #tpu.pipeline_mode<synchronous>, transform_indices = @transform_5, window_bounds = array<i64: 128, 128>}, {pipeline_mode = #tpu.pipeline_mode<synchronous>, transform_indices = @transform_6, window_bounds = array<i64: 1, 128>}, {pipeline_mode = #tpu.pipeline_mode<synchronous>, transform_indices = @transform_7, window_bounds = array<i64: 2, 128>}]} {
    %c0 = arith.constant 0 : index
    %c0_0 = arith.constant 0 : index
    %0 = vector.load %arg1[%c0, %c0_0] : memref<2x400xbf16, #tpu.memory_space<vmem>>, vector<2x400xbf16>
    %c0_1 = arith.constant 0 : index
    %c0_2 = arith.constant 0 : index
    %1 = vector.load %arg2[%c0_1, %c0_2] : memref<400x128xbf16, #tpu.memory_space<vmem>>, vector<400x128xbf16>
    %cst = arith.constant dense<0.000000e+00> : vector<2x128xf32>
    %2 = tpu.matmul %0, %1, %cst {dimension_numbers = #tpu.dot_dimension_numbers<[1], [0], [0], [1], [0, 0, 1, 1], [], []>} : vector<2x400xbf16>, vector<400x128xbf16>, vector<2x128xf32> -> vector<2x128xf32>
    %c0_3 = arith.constant 0 : index
    %c0_4 = arith.constant 0 : index
    %3 = vector.load %arg3[%c0_3, %c0_4] : memref<1x128xf32, #tpu.memory_space<vmem>>, vector<1x128xf32>
    %4 = vector.broadcast %3 : vector<1x128xf32> to vector<2x128xf32>
    %5 = arith.addf %2, %4 : vector<2x128xf32>
    %cst_5 = arith.constant 0.000000e+00 : f32
    %6 = vector.broadcast %cst_5 : f32 to vector<2x128xf32>
    %7 = arith.maximumf %5, %6 : vector<2x128xf32>
    %8 = arith.truncf %7 : vector<2x128xf32> to vector<2x128xbf16>
    %c0_6 = arith.constant 0 : index
    %c0_7 = arith.constant 0 : index
    %9 = vector.load %arg4[%c0_6, %c0_7] : memref<128x128xbf16, #tpu.memory_space<vmem>>, vector<128x128xbf16>
    %cst_8 = arith.constant dense<0.000000e+00> : vector<2x128xf32>
    %10 = tpu.matmul %8, %9, %cst_8 {dimension_numbers = #tpu.dot_dimension_numbers<[1], [0], [0], [1], [0, 0, 1, 1], [], []>} : vector<2x128xbf16>, vector<128x128xbf16>, vector<2x128xf32> -> vector<2x128xf32>
    %c0_9 = arith.constant 0 : index
    %c0_10 = arith.constant 0 : index
    %11 = vector.load %arg5[%c0_9, %c0_10] : memref<1x128xf32, #tpu.memory_space<vmem>>, vector<1x128xf32>
    %12 = vector.broadcast %11 : vector<1x128xf32> to vector<2x128xf32>
    %13 = arith.addf %10, %12 : vector<2x128xf32>
    %cst_11 = arith.constant 0.000000e+00 : f32
    %14 = vector.broadcast %cst_11 : f32 to vector<2x128xf32>
    %15 = arith.maximumf %13, %14 : vector<2x128xf32>
    %16 = arith.truncf %15 : vector<2x128xf32> to vector<2x128xbf16>
    %c0_12 = arith.constant 0 : index
    %c0_13 = arith.constant 0 : index
    %17 = vector.load %arg6[%c0_12, %c0_13] : memref<128x128xbf16, #tpu.memory_space<vmem>>, vector<128x128xbf16>
    %cst_14 = arith.constant dense<0.000000e+00> : vector<2x128xf32>
    %18 = tpu.matmul %16, %17, %cst_14 {dimension_numbers = #tpu.dot_dimension_numbers<[1], [0], [0], [1], [0, 0, 1, 1], [], []>} : vector<2x128xbf16>, vector<128x128xbf16>, vector<2x128xf32> -> vector<2x128xf32>
    %c0_15 = arith.constant 0 : index
    %c0_16 = arith.constant 0 : index
    %19 = vector.load %arg7[%c0_15, %c0_16] : memref<1x128xf32, #tpu.memory_space<vmem>>, vector<1x128xf32>
    %20 = vector.broadcast %19 : vector<1x128xf32> to vector<2x128xf32>
    %21 = arith.addf %18, %20 : vector<2x128xf32>
    %c0_17 = arith.constant 0 : index
    %c0_18 = arith.constant 0 : index
    %22 = vector.load %arg8[%c0_17, %c0_18] : memref<2x128xf32, #tpu.memory_space<vmem>>, vector<2x128xf32>
    tpu.vector_store %arg8[%c0_17, %c0_18], %21 {strides = array<i32>} : memref<2x128xf32, #tpu.memory_space<vmem>>, vector<2x128xf32>,
    return
  }
  func.func @transform_0(%arg0: i32) -> (i32, i32) {
    %c0_i32 = arith.constant 0 : i32
    %c0_i32_0 = arith.constant 0 : i32
    %c0_i32_1 = arith.constant 0 : i32
    return %c0_i32, %c0_i32_0 : i32, i32
  }
  func.func @transform_1(%arg0: i32) -> (i32, i32) {
    %c0_i32 = arith.constant 0 : i32
    %c0_i32_0 = arith.constant 0 : i32
    %c0_i32_1 = arith.constant 0 : i32
    return %c0_i32, %c0_i32_0 : i32, i32
  }
  func.func @transform_2(%arg0: i32) -> (i32, i32) {
    %c0_i32 = arith.constant 0 : i32
    %c0_i32_0 = arith.constant 0 : i32
    %c0_i32_1 = arith.constant 0 : i32
    return %c0_i32, %c0_i32_0 : i32, i32
  }
  func.func @transform_3(%arg0: i32) -> (i32, i32) {
    %c0_i32 = arith.constant 0 : i32
    %c0_i32_0 = arith.constant 0 : i32
    %c0_i32_1 = arith.constant 0 : i32
    return %c0_i32, %c0_i32_0 : i32, i32
  }
  func.func @transform_4(%arg0: i32) -> (i32, i32) {
    %c0_i32 = arith.constant 0 : i32
    %c0_i32_0 = arith.constant 0 : i32
    %c0_i32_1 = arith.constant 0 : i32
    return %c0_i32, %c0_i32_0 : i32, i32
  }
  func.func @transform_5(%arg0: i32) -> (i32, i32) {
    %c0_i32 = arith.constant 0 : i32
    %c0_i32_0 = arith.constant 0 : i32
    %c0_i32_1 = arith.constant 0 : i32
    return %c0_i32, %c0_i32_0 : i32, i32
  }
  func.func @transform_6(%arg0: i32) -> (i32, i32) {
    %c0_i32 = arith.constant 0 : i32
    %c0_i32_0 = arith.constant 0 : i32
    %c0_i32_1 = arith.constant 0 : i32
    return %c0_i32, %c0_i32_0 : i32, i32
  }
  func.func @transform_7(%arg0: i32) -> (i32, i32) {
    %c0_i32 = arith.constant 0 : i32
    %c0_i32_0 = arith.constant 0 : i32
    %c0_i32_1 = arith.constant 0 : i32
    return %c0_i32, %c0_i32_0 : i32, i32
  }
}

</mosaic_0001>

<llo_original>
// kernel: net_forward.3
$region0: #{net_forward.3}
  #allocation0 [shape = 'u32[]', space=smem, size = 0x4, offset = 0x4, fixed_abs, tag = 'smem constant byte address 0x4 - core index']
  #allocation1 [shape = 'u32[144,128]{1,0:T(1,128)}', space=vmem, size = 0x12000, scoped, tag = 'internal scratch']
  %s0 = inlined_call_operand.vmem [shape: bf16[1568,75], index: 0, kind: input, shape index: {}]
  %s1 = inlined_call_operand.vmem [shape: bf16[75,128], index: 1, kind: input, shape index: {}]
  %s2 = inlined_call_operand.vmem [shape: f32[1,128], index: 2, kind: input, shape index: {}]
  %s3 = inlined_call_operand.vmem [shape: bf16[1568,128], index: 3, kind: output, shape index: {}]
  %s4 = sld [smem:[#allocation0]]
  $region45: #{net_forward.3} parent=0
    _
  %s6 = ssub.s32 1, %s4
  %s7 = scalar_select 0, %s6, %s4
  loop: start=0, step=1, limit=9
  $region2: #{net_forward.3} parent=0 // loop_pre_header
    _
  $region3: #{net_forward.3} parent=0 // loop_header
    %s9 = sphi 0, %s13
    %p10 = scmp.ge.s32.totalorder %s9, 9
    %s19 = sphi 0, %s21
    %s22 = sphi 0, %s19
    %s23 = sphi 0, %s22
    %s39 = sphi 0, %s23
    %s43 = sphi 0, %s43
    %s45 = sphi 0, %s43
    %s46 = sphi 0, %s45
    %s60 = sphi 0, %s46
    %s64 = sphi 0, %s64
    %s66 = sphi 0, %s64
    %s67 = sphi 0, %s66
    %s81 = sphi 0, %s67
    %s87 = sphi 0, %s89
    %s90 = sphi 0, %s87
    %s91 = sphi 0, %s90
    %s107 = sphi 0, %s91
  $region4: #{net_forward.3} parent=0 // loop_header_branch
    %12 = sbr.rel (%p10) target = $region8
  $region5: #{net_forward.3} parent=0 // loop_body
    %s14 = ssub.s32 %s9, 1
    %s15 = ssub.s32 %s9, 2
    %s16 = sadd.s32 %s9, 1
    %s17 = ssub.s32 %s9, %s16
    %p18 = scmp.eq.s32.totalorder %s17, 0
    %s20 = sadd.s32 %s19, 1
    %s21 = scalar_select %p18, %s19, %s20
    %p24 = pneg %p18
    %p25 = scmp.eq.s32.totalorder %s9, 6
    %p26 = por %p24, %p25
    %p27 = scmp.ne.s32.totalorder %s19, %s22
    %p28 = scmp.eq.s32.totalorder %s9, 0
    %p29 = por %p27, %p28
    %p30 = scmp.ne.s32.totalorder %s19, %s22
    %p31 = scmp.eq.s32.totalorder %s14, 6
    %p32 = por %p30, %p31
    %p33 = scmp.ne.s32.totalorder %s22, %s23
    %p34 = scmp.eq.s32.totalorder %s14, 0
    %p35 = por %p33, %p34
    %p36 = scmp.ne.s32.totalorder %s22, %s23
    %p37 = scmp.eq.s32.totalorder %s15, 6
    %p38 = por %p36, %p37
    %p40 = scmp.ne.s32.totalorder %s23, %s39
    %p41 = scmp.eq.s32.totalorder %s15, 0
    %p42 = por %p40, %p41
    %s44 = sadd.s32 %s43, 1
    %p47 = scmp.eq.s32.totalorder %s9, 6
    %p48 = scmp.ne.s32.totalorder %s43, %s45
    %p49 = scmp.eq.s32.totalorder %s9, 0
    %p50 = por %p48, %p49
    %p51 = scmp.ne.s32.totalorder %s43, %s45
    %p52 = scmp.eq.s32.totalorder %s14, 6
    %p53 = por %p51, %p52
    %p54 = scmp.ne.s32.totalorder %s45, %s46
    %p55 = scmp.eq.s32.totalorder %s14, 0
    %p56 = por %p54, %p55
    %p57 = scmp.ne.s32.totalorder %s45, %s46
    %p58 = scmp.eq.s32.totalorder %s15, 6
    %p59 = por %p57, %p58
    %p61 = scmp.ne.s32.totalorder %s46, %s60
    %p62 = scmp.eq.s32.totalorder %s15, 0
    %p63 = por %p61, %p62
    %s65 = sadd.s32 %s64, 1
    %p68 = scmp.eq.s32.totalorder %s9, 6
    %p69 = scmp.ne.s32.totalorder %s64, %s66
    %p70 = scmp.eq.s32.totalorder %s9, 0
    %p71 = por %p69, %p70
    %p72 = scmp.ne.s32.totalorder %s64, %s66
    %p73 = scmp.eq.s32.totalorder %s14, 6
    %p74 = por %p72, %p73
    %p75 = scmp.ne.s32.totalorder %s66, %s67
    %p76 = scmp.eq.s32.totalorder %s14, 0
    %p77 = por %p75, %p76
    %p78 = scmp.ne.s32.totalorder %s66, %s67
    %p79 = scmp.eq.s32.totalorder %s15, 6
    %p80 = por %p78, %p79
    %p82 = scmp.ne.s32.totalorder %s67, %s81
    %p83 = scmp.eq.s32.totalorder %s15, 0
    %p84 = por %p82, %p83
    %s85 = ssub.s32 %s9, %s16
    %p86 = scmp.eq.s32.totalorder %s85, 0
    %s88 = sadd.s32 %s87, 1
    %s89 = scalar_select %p86, %s87, %s88
    %p92 = pneg %p86
    %p93 = scmp.eq.s32.totalorder %s9, 6
    %p94 = por %p92, %p93
    %p95 = scmp.ne.s32.totalorder %s87, %s90
    %p96 = scmp.eq.s32.totalorder %s9, 0
    %p97 = por %p95, %p96
    %p98 = scmp.ne.s32.totalorder %s87, %s90
    %p99 = scmp.eq.s32.totalorder %s14, 6
    %p100 = por %p98, %p99
    %p101 = scmp.ne.s32.totalorder %s90, %s91
    %p102 = scmp.eq.s32.totalorder %s14, 0
    %p103 = por %p101, %p102
    %p104 = scmp.ne.s32.totalorder %s90, %s91
    %p105 = scmp.eq.s32.totalorder %s15, 6
    %p106 = por %p104, %p105
    %p108 = scmp.ne.s32.totalorder %s91, %s107
    %p109 = scmp.eq.s32.totalorder %s15, 0
    %p110 = por %p108, %p109
    %p111 = scmp.le.s32.totalorder 1, %s9
    %p112 = scmp.lt.s32.totalorder %s9, 8
    %p113 = pnand %p111, %p112
    %p114 = pneg %p113
    // Predicated region
    $region9: #{net_forward.3} parent=5 // pred_check
      _
    $region10: #{net_forward.3} parent=5 // pred_check_branch
      %116 = sbr.rel (%p113) target = $region12
    $region11: #{net_forward.3} parent=5 // pred_region
      %s117 = ssub.s32 %s9, 1
      // Predicated region
      $region13: #{net_forward.3} parent=11 // pred_check
        %p118 = pneg %p56
      $region14: #{net_forward.3} parent=11 // pred_check_branch
        %120 = sbr.rel (%p118) target = $region16
      $region15: #{net_forward.3} parent=11 // pred_region
        _
      $region16: #{net_forward.3} parent=11 // pred_fallthru
        _
      // Predicated region
      $region17: #{net_forward.3} parent=11 // pred_check
        %p121 = pneg %p77
      $region18: #{net_forward.3} parent=11 // pred_check_branch
        %123 = sbr.rel (%p121) target = $region20
      $region19: #{net_forward.3} parent=11 // pred_region
        _
      $region20: #{net_forward.3} parent=11 // pred_fallthru
        _
    $region12: #{net_forward.3} parent=5 // pred_fallthru
      _
    %p124 = scmp.lt.s32.totalorder %s9, 7
    // Predicated region
    $region21: #{net_forward.3} parent=5 // pred_check
      %p125 = pneg %p124
    $region22: #{net_forward.3} parent=5 // pred_check_branch
      %127 = sbr.rel (%p125) target = $region24
    $region23: #{net_forward.3} parent=5 // pred_region
      // Predicated region
      $region25: #{net_forward.3} parent=23 // pred_check
        %p128 = pneg %p29
      $region26: #{net_forward.3} parent=23 // pred_check_branch
        %130 = sbr.rel (%p128) target = $region28
      $region27: #{net_forward.3} parent=23 // pred_region
        %s131 = smul.u32 28, %s9
        %p132 = scmp.lt.s32.totalorder %s131, 195
        %s133 = scalar_select %p132, %s131, 195
        %s134 = smul.addr %s133, 4
        %s135 = scalar_lea.vmem %s0, %s134
        %s136 = smul.u32 28, %s9
      $region28: #{net_forward.3} parent=23 // pred_fallthru
        _
    $region24: #{net_forward.3} parent=5 // pred_fallthru
      _
    %p137 = scmp.le.s32.totalorder 1, %s9
    %p138 = scmp.lt.s32.totalorder %s9, 8
    %p139 = pnand %p137, %p138
    %p140 = pneg %p139
    // Predicated region
    $region29: #{net_forward.3} parent=5 // pred_check
      _
    $region30: #{net_forward.3} parent=5 // pred_check_branch
      %142 = sbr.rel (%p139) target = $region32
    $region31: #{net_forward.3} parent=5 // pred_region
      %s143 = ssub.s32 %s9, 1
      %s144 = smul.u32 28, %s14
      %p145 = scmp.lt.s32.totalorder %s144, 195
      %s146 = scalar_select %p145, %s144, 195
      %s147 = smul.addr %s146, 4
      %s148 = scalar_lea.vmem %s0, %s147
      %p149 = pneg %p35
      %p150 = pneg %p32
      %p151 = pneg %p56
      %p152 = pneg %p53
      %p153 = pneg %p77
      %p154 = pneg %p74
      %p155 = pneg %p103
      %p156 = pneg %p100
      %s157 = smul.u32 28, %s14
      %p158 = scmp.lt.s32.totalorder %s157, 195
      %s159 = scalar_select %p158, %s157, 195
      %s160 = smul.addr %s159, 4
      %s161 = scalar_lea.vmem %s3, %s160
      %s162 = smul.u32 28, %s14
      %p163 = scmp.lt.s32.totalorder %s162, 195
      %s164 = scalar_select %p163, %s162, 195
      %s165 = smul.addr %s164, 4
      %s166 = scalar_lea.vmem %s0, %s165
      %s167 = smul.u32 28, %s14
      %s168 = smul.u32 28, %s14
      %p169 = scmp.lt.s32.totalorder %s168, 195
      %s170 = scalar_select %p169, %s168, 195
      %s171 = smul.addr %s170, 4
      %s172 = scalar_lea.vmem %s3, %s171
      %s173 = smul.u32 28, %s14
      %v175 = vld [vmem:[%s166] sm:$0xf]
      %v176 = vld [vmem:[%s166 + $0x4] sm:$0xf]
      %v177 = vld [vmem:[%s166 + $0x8] sm:$0xf]
      %v178 = vld [vmem:[%s166 + $0xc] sm:$0xf]
      %v179 = vld [vmem:[%s166 + $0x10] sm:$0xf]
      %v180 = vld [vmem:[%s166 + $0x14] sm:$0xf]
      %v181 = vld [vmem:[%s166 + $0x18] sm:$0xf]
      %v182 = vld [vmem:[%s166 + $0x1c] sm:$0xf]
      %v183 = vld [vmem:[%s166 + $0x20] sm:$0xf]
      %v184 = vld [vmem:[%s166 + $0x24] sm:$0xf]
      %v185 = vld [vmem:[%s166 + $0x28] sm:$0xf]
      %v186 = vld [vmem:[%s166 + $0x2c] sm:$0xf]
      %v187 = vld [vmem:[%s166 + $0x30] sm:$0xf]
      %v188 = vld [vmem:[%s166 + $0x34] sm:$0xf]
      %v189 = vld [vmem:[%s166 + $0x38] sm:$0xf]
      %v190 = vld [vmem:[%s166 + $0x3c] sm:$0xf]
      %v191 = vld [vmem:[%s166 + $0x40] sm:$0xf]
      %v192 = vld [vmem:[%s166 + $0x44] sm:$0xf]
      %v193 = vld [vmem:[%s166 + $0x48] sm:$0xf]
      %v194 = vld [vmem:[%s166 + $0x4c] sm:$0xf]
      %v195 = vld [vmem:[%s166 + $0x50] sm:$0xf]
      %v196 = vld [vmem:[%s166 + $0x54] sm:$0xf]
      %v197 = vld [vmem:[%s166 + $0x58] sm:$0xf]
      %v198 = vld [vmem:[%s166 + $0x5c] sm:$0xf]
      %v199 = vld [vmem:[%s166 + $0x60] sm:$0xf]
      %v200 = vld [vmem:[%s166 + $0x64] sm:$0xf]
      %v201 = vld [vmem:[%s166 + $0x68] sm:$0xf]
      %v202 = vld [vmem:[%s166 + $0x6c] sm:$0xf]
      %v203 = vld [vmem:[%s1] sm:$0xf]
      %v204 = vld [vmem:[%s1 + $0x4] sm:$0xf]
      %v205 = vld [vmem:[%s1 + $0x8] sm:$0xf]
      %v206 = vld [vmem:[%s1 + $0xc] sm:$0xf]
      %v207 = vld [vmem:[%s1 + $0x10] sm:$0xf]
      %v208 = vld [vmem:[%s1 + $0x14] sm:$0xf]
      %v209 = vld [vmem:[%s1 + $0x18] sm:$0xf]
      %v210 = vld [vmem:[%s1 + $0x1c] sm:$0xf]
      %v211 = vld [vmem:[%s1 + $0x20] sm:$0xf]
      %v212 = vld [vmem:[%s1 + $0x24] sm:$0x3]
      %v213 = vld [vmem:[%s2] sm:$0x1]
      %v215 = vlaneseq
      %v216 = vshrl.u32 %v215, 7
      %v217 = vsub.s32 0, %v216
      %v218 = vrot.slane %v213, %v217
      %v248 = vunpack.c.l.b16 %v175
      %v249 = vunpack.c.l.b16 %v176
      %v250 = vunpack.c.l.b16 %v177
      %v251 = vunpack.c.l.b16 %v178
      %v252 = vunpack.c.l.b16 %v179
      %v253 = vunpack.c.l.b16 %v180
      %v254 = vunpack.c.l.b16 %v181
      %v255 = vunpack.c.l.b16 %v182
      %v256 = vunpack.c.l.b16 %v183
      %v257 = vunpack.c.l.b16 %v184
      %v258 = vunpack.c.l.b16 %v185
      %v259 = vunpack.c.l.b16 %v186
      %v260 = vunpack.c.l.b16 %v187
      %v261 = vunpack.c.l.b16 %v188
      %v262 = vunpack.c.l.b16 %v189
      %v263 = vunpack.c.l.b16 %v190
      %v264 = vunpack.c.l.b16 %v191
      %v265 = vunpack.c.l.b16 %v192
      %v266 = vunpack.c.l.b16 %v193
      %v267 = vunpack.c.l.b16 %v194
      %v268 = vunpack.c.l.b16 %v195
      %v269 = vunpack.c.l.b16 %v196
      %v270 = vunpack.c.l.b16 %v197
      %v271 = vunpack.c.l.b16 %v198
      %v272 = vunpack.c.l.b16 %v199
      %v273 = vunpack.c.l.b16 %v200
      %v274 = vunpack.c.l.b16 %v201
      %v275 = vunpack.c.l.b16 %v202
      %v276 = vpack.c.b16 %v249, %v248
      %v277 = vpack.c.b16 %v251, %v250
      %v278 = vpack.c.b16 %v253, %v252
      %v279 = vpack.c.b16 %v255, %v254
      %v280 = vpack.c.b16 %v257, %v256
      %v281 = vpack.c.b16 %v259, %v258
      %v282 = vpack.c.b16 %v261, %v260
      %v283 = vpack.c.b16 %v263, %v262
      %v284 = vpack.c.b16 %v265, %v264
      %v285 = vpack.c.b16 %v267, %v266
      %v286 = vpack.c.b16 %v269, %v268
      %v287 = vpack.c.b16 %v271, %v270
      %v288 = vpack.c.b16 %v273, %v272
      %v289 = vpack.c.b16 %v275, %v274
      %v300 = vunpack.c.l.b16 %v203
      %v301 = vunpack.c.l.b16 %v204
      %v302 = vunpack.c.l.b16 %v205
      %v303 = vunpack.c.l.b16 %v206
      %v304 = vunpack.c.l.b16 %v207
      %v305 = vunpack.c.l.b16 %v208
      %v306 = vunpack.c.l.b16 %v209
      %v307 = vunpack.c.l.b16 %v210
      %v308 = vunpack.c.l.b16 %v211
      %v309 = vunpack.c.l.b16 %v212
      %v310 = vpack.c.b16 %v301, %v300
      %v311 = vpack.c.b16 %v303, %v302
      %v312 = vpack.c.b16 %v305, %v304
      %v313 = vpack.c.b16 %v307, %v306
      %v314 = vpack.c.b16 %v309, %v308
      %vm319 = vcmask 613376
      %v321 = vsel %vm319, %v276, 0
      %v324 = vsel %vm319, %v277, 0
      %v327 = vsel %vm319, %v278, 0
      %v330 = vsel %vm319, %v279, 0
      %v333 = vsel %vm319, %v280, 0
      %v336 = vsel %vm319, %v281, 0
      %v339 = vsel %vm319, %v282, 0
      %v342 = vsel %vm319, %v283, 0
      %v345 = vsel %vm319, %v284, 0
      %v348 = vsel %vm319, %v285, 0
      %v351 = vsel %vm319, %v286, 0
      %v354 = vsel %vm319, %v287, 0
      %v357 = vsel %vm319, %v288, 0
      %v360 = vsel %vm319, %v289, 0
      %vm362 = vcmask 1044480
      %vm363 = vcmask 1045504
      %v364 = vsel %vm362, 4294967295, 65535
      %v365 = vsel %vm363, %v364, 0
      %v367 = vand.u32 %v314, %v365
      %369 = vmatprep.subr.bf16.mxu0 0
      %370 = vmatpush1.bf16.msra.mxu0 %v310
      %371 = vmatprep.subr.bf16.mxu0 0
      %372 = vmatpush1.bf16.msra.mxu0 %v311
      %373 = vmatprep.subr.bf16.mxu0 0
      %374 = vmatpush1.bf16.msra.mxu0 %v312
      %375 = vmatprep.subr.bf16.mxu0 0
      %376 = vmatpush1.bf16.msra.mxu0 %v313
      %377 = vmatprep.subr.bf16.mxu0 0
      %378 = vmatpush1.bf16.msra.mxu0 %v367
      %379 = vmatprep.subr.bf16.mxu0 0
      %380 = vmatpush1.bf16.msra.mxu0 0
      %381 = vmatprep.subr.bf16.mxu0 0
      %382 = vmatpush1.bf16.msra.mxu0 0
      %383 = vmatprep.subr.bf16.mxu0 0
      %384 = vmatpush1.bf16.msra.mxu0 0
      %385 = vmatprep.subr.bf16.mxu0 0
      %386 = vmatpush1.bf16.msra.mxu0 0
      %387 = vmatprep.subr.bf16.mxu0 0
      %388 = vmatpush1.bf16.msra.mxu0 0
      %389 = vmatprep.subr.bf16.mxu0 0
      %390 = vmatpush1.bf16.msra.mxu0 0
      %391 = vmatprep.subr.bf16.mxu0 0
      %392 = vmatpush1.bf16.msra.mxu0 0
      %393 = vmatprep.subr.bf16.mxu0 0
      %394 = vmatpush1.bf16.msra.mxu0 0
      %395 = vmatprep.subr.bf16.mxu0 0
      %396 = vmatpush1.bf16.msra.mxu0 0
      %397 = vmatprep.subr.bf16.mxu0 0
      %398 = vmatpush1.bf16.msra.mxu0 0
      %399 = vmatprep.subr.bf16.mxu0 0
      %400 = vmatpush1.bf16.msra.mxu0 0
      %401 = vmatprep.mubr.bf16.mxu0 0
      %402 = vmatmul.mubr.bf16.gmra.mrb[0].mxu0 %v321
      %v403 = vpop.f32.mrb[0].mxu0
      %v404 = vadd.f32 %v218, %v403
      %v405 = vpop.f32.mrb[0].mxu0
      %v406 = vpop.f32.mrb[0].mxu0
      %v407 = vadd.f32 %v218, %v406
      %v408 = vpop.f32.mrb[0].mxu0
      %409 = vmatprep.mubr.bf16.mxu0 0
      %410 = vmatmul.mubr.bf16.gmra.mrb[0].mxu0 %v324
      %v411 = vpop.f32.mrb[0].mxu0
      %v412 = vadd.f32 %v218, %v411
      %v413 = vpop.f32.mrb[0].mxu0
      %v414 = vpop.f32.mrb[0].mxu0
      %v415 = vadd.f32 %v218, %v414
      %v416 = vpop.f32.mrb[0].mxu0
      %417 = vmatprep.mubr.bf16.mxu0 0
      %418 = vmatmul.mubr.bf16.gmra.mrb[0].mxu0 %v327
      %v419 = vpop.f32.mrb[0].mxu0
      %v420 = vadd.f32 %v218, %v419
      %v421 = vpop.f32.mrb[0].mxu0
      %v422 = vpop.f32.mrb[0].mxu0
      %v423 = vadd.f32 %v218, %v422
      %v424 = vpop.f32.mrb[0].mxu0
      %425 = vmatprep.mubr.bf16.mxu0 0
      %426 = vmatmul.mubr.bf16.gmra.mrb[0].mxu0 %v330
      %v427 = vpop.f32.mrb[0].mxu0
      %v428 = vadd.f32 %v218, %v427
      %v429 = vpop.f32.mrb[0].mxu0
      %v430 = vpop.f32.mrb[0].mxu0
      %v431 = vadd.f32 %v218, %v430
      %v432 = vpop.f32.mrb[0].mxu0
      %433 = vmatprep.mubr.bf16.mxu0 0
      %434 = vmatmul.mubr.bf16.gmra.mrb[0].mxu0 %v333
      %v435 = vpop.f32.mrb[0].mxu0
      %v436 = vadd.f32 %v218, %v435
      %v437 = vpop.f32.mrb[0].mxu0
      %v438 = vpop.f32.mrb[0].mxu0
      %v439 = vadd.f32 %v218, %v438
      %v440 = vpop.f32.mrb[0].mxu0
      %441 = vmatprep.mubr.bf16.mxu0 0
      %442 = vmatmul.mubr.bf16.gmra.mrb[0].mxu0 %v336
      %v443 = vpop.f32.mrb[0].mxu0
      %v444 = vadd.f32 %v218, %v443
      %v445 = vpop.f32.mrb[0].mxu0
      %v446 = vpop.f32.mrb[0].mxu0
      %v447 = vadd.f32 %v218, %v446
      %v448 = vpop.f32.mrb[0].mxu0
      %449 = vmatprep.mubr.bf16.mxu0 0
      %450 = vmatmul.mubr.bf16.gmra.mrb[0].mxu0 %v339
      %v451 = vpop.f32.mrb[0].mxu0
      %v452 = vadd.f32 %v218, %v451
      %v453 = vpop.f32.mrb[0].mxu0
      %v454 = vpop.f32.mrb[0].mxu0
      %v455 = vadd.f32 %v218, %v454
      %v456 = vpop.f32.mrb[0].mxu0
      %457 = vmatprep.mubr.bf16.mxu0 0
      %458 = vmatmul.mubr.bf16.gmra.mrb[0].mxu0 %v342
      %v459 = vpop.f32.mrb[0].mxu0
      %v460 = vadd.f32 %v218, %v459
      %v461 = vpop.f32.mrb[0].mxu0
      %v462 = vpop.f32.mrb[0].mxu0
      %v463 = vadd.f32 %v218, %v462
      %v464 = vpop.f32.mrb[0].mxu0
      %465 = vmatprep.mubr.bf16.mxu0 0
      %466 = vmatmul.mubr.bf16.gmra.mrb[0].mxu0 %v345
      %v467 = vpop.f32.mrb[0].mxu0
      %v468 = vadd.f32 %v218, %v467
      %v469 = vpop.f32.mrb[0].mxu0
      %v470 = vpop.f32.mrb[0].mxu0
      %v471 = vadd.f32 %v218, %v470
      %v472 = vpop.f32.mrb[0].mxu0
      %473 = vmatprep.mubr.bf16.mxu0 0
      %474 = vmatmul.mubr.bf16.gmra.mrb[0].mxu0 %v348
      %v475 = vpop.f32.mrb[0].mxu0
      %v476 = vadd.f32 %v218, %v475
      %v477 = vpop.f32.mrb[0].mxu0
      %v478 = vpop.f32.mrb[0].mxu0
      %v479 = vadd.f32 %v218, %v478
      %v480 = vpop.f32.mrb[0].mxu0
      %481 = vmatprep.mubr.bf16.mxu0 0
      %482 = vmatmul.mubr.bf16.gmra.mrb[0].mxu0 %v351
      %v483 = vpop.f32.mrb[0].mxu0
      %v484 = vadd.f32 %v218, %v483
      %v485 = vpop.f32.mrb[0].mxu0
      %v486 = vpop.f32.mrb[0].mxu0
      %v487 = vadd.f32 %v218, %v486
      %v488 = vpop.f32.mrb[0].mxu0
      %489 = vmatprep.mubr.bf16.mxu0 0
      %490 = vmatmul.mubr.bf16.gmra.mrb[0].mxu0 %v354
      %v491 = vpop.f32.mrb[0].mxu0
      %v492 = vadd.f32 %v218, %v491
      %v493 = vpop.f32.mrb[0].mxu0
      %v494 = vpop.f32.mrb[0].mxu0
      %v495 = vadd.f32 %v218, %v494
      %v496 = vpop.f32.mrb[0].mxu0
      %497 = vmatprep.mubr.bf16.mxu0 0
      %498 = vmatmul.mubr.bf16.gmra.mrb[0].mxu0 %v357
      %v499 = vpop.f32.mrb[0].mxu0
      %v500 = vadd.f32 %v218, %v499
      %v501 = vpop.f32.mrb[0].mxu0
      %v502 = vpop.f32.mrb[0].mxu0
      %v503 = vadd.f32 %v218, %v502
      %v504 = vpop.f32.mrb[0].mxu0
      %505 = vmatprep.mubr.bf16.mxu0 0
      %506 = vmatmul.mubr.bf16.gmra.mrb[0].mxu0 %v360
      %v507 = vpop.f32.mrb[0].mxu0
      %v508 = vadd.f32 %v218, %v507
      %v509 = vpop.f32.mrb[0].mxu0
      %v510 = vpop.f32.mrb[0].mxu0
      %v511 = vadd.f32 %v218, %v510
      %v512 = vpop.f32.mrb[0].mxu0
      %513 = vdwg.mxu0
      %v514 = vmax.f32 %v404, 0.0
      %v515 = vmax.f32 %v407, 0.0
      %v516 = vmax.f32 %v412, 0.0
      %v517 = vmax.f32 %v415, 0.0
      %v518 = vmax.f32 %v420, 0.0
      %v519 = vmax.f32 %v423, 0.0
      %v520 = vmax.f32 %v428, 0.0
      %v521 = vmax.f32 %v431, 0.0
      %v522 = vmax.f32 %v436, 0.0
      %v523 = vmax.f32 %v439, 0.0
      %v524 = vmax.f32 %v444, 0.0
      %v525 = vmax.f32 %v447, 0.0
      %v526 = vmax.f32 %v452, 0.0
      %v527 = vmax.f32 %v455, 0.0
      %v528 = vmax.f32 %v460, 0.0
      %v529 = vmax.f32 %v463, 0.0
      %v530 = vmax.f32 %v468, 0.0
      %v531 = vmax.f32 %v471, 0.0
      %v532 = vmax.f32 %v476, 0.0
      %v533 = vmax.f32 %v479, 0.0
      %v534 = vmax.f32 %v484, 0.0
      %v535 = vmax.f32 %v487, 0.0
      %v536 = vmax.f32 %v492, 0.0
      %v537 = vmax.f32 %v495, 0.0
      %v538 = vmax.f32 %v500, 0.0
      %v539 = vmax.f32 %v503, 0.0
      %v540 = vmax.f32 %v508, 0.0
      %v541 = vmax.f32 %v511, 0.0
      %v542 = vpack.c.bf16 %v515, %v514
      %v543 = vpack.c.bf16 %v517, %v516
      %v544 = vpack.c.bf16 %v519, %v518
      %v545 = vpack.c.bf16 %v521, %v520
      %v546 = vpack.c.bf16 %v523, %v522
      %v547 = vpack.c.bf16 %v525, %v524
      %v548 = vpack.c.bf16 %v527, %v526
      %v549 = vpack.c.bf16 %v529, %v528
      %v550 = vpack.c.bf16 %v531, %v530
      %v551 = vpack.c.bf16 %v533, %v532
      %v552 = vpack.c.bf16 %v535, %v534
      %v553 = vpack.c.bf16 %v537, %v536
      %v554 = vpack.c.bf16 %v539, %v538
      %v555 = vpack.c.bf16 %v541, %v540
      %v570 = vunpack.c.l.b16 %v542
      %v571 = vunpack.c.h.b16 %v542
      %v572 = vunpack.c.l.b16 %v543
      %v573 = vunpack.c.h.b16 %v543
      %v574 = vunpack.c.l.b16 %v544
      %v575 = vunpack.c.h.b16 %v544
      %v576 = vunpack.c.l.b16 %v545
      %v577 = vunpack.c.h.b16 %v545
      %v578 = vunpack.c.l.b16 %v546
      %v579 = vunpack.c.h.b16 %v546
      %v580 = vunpack.c.l.b16 %v547
      %v581 = vunpack.c.h.b16 %v547
      %v582 = vunpack.c.l.b16 %v548
      %v583 = vunpack.c.h.b16 %v548
      %v584 = vunpack.c.l.b16 %v549
      %v585 = vunpack.c.h.b16 %v549
      %v586 = vunpack.c.l.b16 %v550
      %v587 = vunpack.c.h.b16 %v550
      %v588 = vunpack.c.l.b16 %v551
      %v589 = vunpack.c.h.b16 %v551
      %v590 = vunpack.c.l.b16 %v552
      %v591 = vunpack.c.h.b16 %v552
      %v592 = vunpack.c.l.b16 %v553
      %v593 = vunpack.c.h.b16 %v553
      %v594 = vunpack.c.l.b16 %v554
      %v595 = vunpack.c.h.b16 %v554
      %v596 = vunpack.c.l.b16 %v555
      %v597 = vunpack.c.h.b16 %v555
      %v598 = vpack.c.b16 %v570, %v570
      %v599 = vpack.c.b16 %v571, %v571
      %v600 = vpack.c.b16 %v572, %v572
      %v601 = vpack.c.b16 %v573, %v573
      %v602 = vpack.c.b16 %v574, %v574
      %v603 = vpack.c.b16 %v575, %v575
      %v604 = vpack.c.b16 %v576, %v576
      %v605 = vpack.c.b16 %v577, %v577
      %v606 = vpack.c.b16 %v578, %v578
      %v607 = vpack.c.b16 %v579, %v579
      %v608 = vpack.c.b16 %v580, %v580
      %v609 = vpack.c.b16 %v581, %v581
      %v610 = vpack.c.b16 %v582, %v582
      %v611 = vpack.c.b16 %v583, %v583
      %v612 = vpack.c.b16 %v584, %v584
      %v613 = vpack.c.b16 %v585, %v585
      %v614 = vpack.c.b16 %v586, %v586
      %v615 = vpack.c.b16 %v587, %v587
      %v616 = vpack.c.b16 %v588, %v588
      %v617 = vpack.c.b16 %v589, %v589
      %v618 = vpack.c.b16 %v590, %v590
      %v619 = vpack.c.b16 %v591, %v591
      %v620 = vpack.c.b16 %v592, %v592
      %v621 = vpack.c.b16 %v593, %v593
      %v622 = vpack.c.b16 %v594, %v594
      %v623 = vpack.c.b16 %v595, %v595
      %v624 = vpack.c.b16 %v596, %v596
      %v625 = vpack.c.b16 %v597, %v597
      %654 = vst [vmem:[%s172] sm:$0xf] %v598
      %655 = vst [vmem:[%s172 + $0x4] sm:$0xf] %v599
      %656 = vst [vmem:[%s172 + $0x8] sm:$0xf] %v600
      %657 = vst [vmem:[%s172 + $0xc] sm:$0xf] %v601
      %658 = vst [vmem:[%s172 + $0x10] sm:$0xf] %v602
      %659 = vst [vmem:[%s172 + $0x14] sm:$0xf] %v603
      %660 = vst [vmem:[%s172 + $0x18] sm:$0xf] %v604
      %661 = vst [vmem:[%s172 + $0x1c] sm:$0xf] %v605
      %662 = vst [vmem:[%s172 + $0x20] sm:$0xf] %v606
      %663 = vst [vmem:[%s172 + $0x24] sm:$0xf] %v607
      %664 = vst [vmem:[%s172 + $0x28] sm:$0xf] %v608
      %665 = vst [vmem:[%s172 + $0x2c] sm:$0xf] %v609
      %666 = vst [vmem:[%s172 + $0x30] sm:$0xf] %v610
      %667 = vst [vmem:[%s172 + $0x34] sm:$0xf] %v611
      %668 = vst [vmem:[%s172 + $0x38] sm:$0xf] %v612
      %669 = vst [vmem:[%s172 + $0x3c] sm:$0xf] %v613
      %670 = vst [vmem:[%s172 + $0x40] sm:$0xf] %v614
      %671 = vst [vmem:[%s172 + $0x44] sm:$0xf] %v615
      %672 = vst [vmem:[%s172 + $0x48] sm:$0xf] %v616
      %673 = vst [vmem:[%s172 + $0x4c] sm:$0xf] %v617
      %674 = vst [vmem:[%s172 + $0x50] sm:$0xf] %v618
      %675 = vst [vmem:[%s172 + $0x54] sm:$0xf] %v619
      %676 = vst [vmem:[%s172 + $0x58] sm:$0xf] %v620
      %677 = vst [vmem:[%s172 + $0x5c] sm:$0xf] %v621
      %678 = vst [vmem:[%s172 + $0x60] sm:$0xf] %v622
      %679 = vst [vmem:[%s172 + $0x64] sm:$0xf] %v623
      %680 = vst [vmem:[%s172 + $0x68] sm:$0xf] %v624
      %681 = vst [vmem:[%s172 + $0x6c] sm:$0xf] %v625
      %s682 = smul.u32 28, %s14
      %p683 = scmp.lt.s32.totalorder %s682, 195
      %s684 = scalar_select %p683, %s682, 195
      %s685 = smul.addr %s684, 4
      %s686 = scalar_lea.vmem %s3, %s685
      // Predicated region
      $region33: #{net_forward.3} parent=31 // pred_check
        %p687 = pneg %p100
      $region34: #{net_forward.3} parent=31 // pred_check_branch
        %689 = sbr.rel (%p687) target = $region36
      $region35: #{net_forward.3} parent=31 // pred_region
        %s690 = smul.u32 28, %s14
      $region36: #{net_forward.3} parent=31 // pred_fallthru
        _
    $region32: #{net_forward.3} parent=5 // pred_fallthru
      _
    %p691 = scmp.le.s32.totalorder 2, %s9
    // Predicated region
    $region37: #{net_forward.3} parent=5 // pred_check
      %p692 = pneg %p691
    $region38: #{net_forward.3} parent=5 // pred_check_branch
      %694 = sbr.rel (%p692) target = $region40
    $region39: #{net_forward.3} parent=5 // pred_region
      %s695 = ssub.s32 %s9, 2
      // Predicated region
      $region41: #{net_forward.3} parent=39 // pred_check
        %p696 = pneg %p106
      $region42: #{net_forward.3} parent=39 // pred_check_branch
        %698 = sbr.rel (%p696) target = $region44
      $region43: #{net_forward.3} parent=39 // pred_region
        %s699 = smul.u32 28, %s15
        %p700 = scmp.lt.s32.totalorder %s699, 195
        %s701 = scalar_select %p700, %s699, 195
        %s702 = smul.addr %s701, 4
        %s703 = scalar_lea.vmem %s3, %s702
      $region44: #{net_forward.3} parent=39 // pred_fallthru
        _
    $region40: #{net_forward.3} parent=5 // pred_fallthru
      _
  $region6: #{net_forward.3} parent=0 // loop_footer
    %s13 = sadd.s32 1, %s9
  $region7: #{net_forward.3} parent=0 // loop_footer_branch
    %8 = sbr.rel target = $region3
  $region8: #{net_forward.3} parent=0 // loop_exit
    _

// kernel: net_forward.4
$region0: #{net_forward.4}
  #allocation0 [shape = 'u32[]', space=smem, size = 0x4, offset = 0x4, fixed_abs, tag = 'smem constant byte address 0x4 - core index']
  #allocation1 [shape = 'u32[144,128]{1,0:T(1,128)}', space=vmem, size = 0x12000, scoped, tag = 'internal scratch']
  %s0 = inlined_call_operand.vmem [shape: bf16[200,150], index: 0, kind: input, shape index: {}]
  %s1 = inlined_call_operand.vmem [shape: bf16[150,128], index: 1, kind: input, shape index: {}]
  %s2 = inlined_call_operand.vmem [shape: f32[1,128], index: 2, kind: input, shape index: {}]
  %s3 = inlined_call_operand.vmem [shape: bf16[200,128], index: 3, kind: output, shape index: {}]
  %s4 = sld [smem:[#allocation0]]
  $region22: #{net_forward.4} parent=0
    _
  %s6 = ssub.s32 1, %s4
  %s7 = scalar_select 0, %s6, %s4
  // Predicated region
  $region2: #{net_forward.4} parent=0 // pred_check
    _
  $region3: #{net_forward.4} parent=0 // pred_check_branch
    %9 = sbr.rel (0) target = $region5
  $region4: #{net_forward.4} parent=0 // pred_region
    _
  $region5: #{net_forward.4} parent=0 // pred_fallthru
    _
  // Predicated region
  $region6: #{net_forward.4} parent=0 // pred_check
    _
  $region7: #{net_forward.4} parent=0 // pred_check_branch
    %11 = sbr.rel (0) target = $region9
  $region8: #{net_forward.4} parent=0 // pred_region
    _
  $region9: #{net_forward.4} parent=0 // pred_fallthru
    _
  // Predicated region
  $region10: #{net_forward.4} parent=0 // pred_check
    _
  $region11: #{net_forward.4} parent=0 // pred_check_branch
    %13 = sbr.rel (0) target = $region13
  $region12: #{net_forward.4} parent=0 // pred_region
    _
  $region13: #{net_forward.4} parent=0 // pred_fallthru
    _
  %v15 = vld [vmem:[%s0] sm:$0xff]
  %v16 = vld [vmem:[%s0 + $0x8] sm:$0xff]
  %v17 = vld [vmem:[%s0 + $0x10] sm:$0xff]
  %v18 = vld [vmem:[%s0 + $0x18] sm:$0xff]
  %v19 = vld [vmem:[%s0 + $0x20] sm:$0xff]
  %v20 = vld [vmem:[%s0 + $0x28] sm:$0xff]
  %v21 = vld [vmem:[%s0 + $0x30] sm:$0xff]
  %v22 = vld [vmem:[%s0 + $0x38] sm:$0xff]
  %v23 = vld [vmem:[%s0 + $0x40] sm:$0xff]
  %v24 = vld [vmem:[%s0 + $0x48] sm:$0xff]
  %v25 = vld [vmem:[%s0 + $0x50] sm:$0xff]
  %v26 = vld [vmem:[%s0 + $0x58] sm:$0xff]
  %v27 = vld [vmem:[%s0 + $0x60] sm:$0xff]
  %v28 = vld [vmem:[%s0 + $0x68] sm:$0xff]
  %v29 = vld [vmem:[%s0 + $0x70] sm:$0xff]
  %v30 = vld [vmem:[%s0 + $0x78] sm:$0xff]
  %v31 = vld [vmem:[%s0 + $0x80] sm:$0xff]
  %v32 = vld [vmem:[%s0 + $0x88] sm:$0xff]
  %v33 = vld [vmem:[%s0 + $0x90] sm:$0xff]
  %v34 = vld [vmem:[%s0 + $0x98] sm:$0xff]
  %v35 = vld [vmem:[%s0 + $0xa0] sm:$0xff]
  %v36 = vld [vmem:[%s0 + $0xa8] sm:$0xff]
  %v37 = vld [vmem:[%s0 + $0xb0] sm:$0xff]
  %v38 = vld [vmem:[%s0 + $0xb8] sm:$0xff]
  %v39 = vld [vmem:[%s0 + $0xc0] sm:$0xff]
  %v40 = vld [vmem:[%s1] sm:$0xf]
  %v41 = vld [vmem:[%s1 + $0x4] sm:$0xf]
  %v42 = vld [vmem:[%s1 + $0x8] sm:$0xf]
  %v43 = vld [vmem:[%s1 + $0xc] sm:$0xf]
  %v44 = vld [vmem:[%s1 + $0x10] sm:$0xf]
  %v45 = vld [vmem:[%s1 + $0x14] sm:$0xf]
  %v46 = vld [vmem:[%s1 + $0x18] sm:$0xf]
  %v47 = vld [vmem:[%s1 + $0x1c] sm:$0xf]
  %v48 = vld [vmem:[%s1 + $0x20] sm:$0xf]
  %v49 = vld [vmem:[%s1 + $0x24] sm:$0xf]
  %v50 = vld [vmem:[%s1 + $0x28] sm:$0xf]
  %v51 = vld [vmem:[%s1 + $0x2c] sm:$0xf]
  %v52 = vld [vmem:[%s1 + $0x30] sm:$0xf]
  %v53 = vld [vmem:[%s1 + $0x34] sm:$0xf]
  %v54 = vld [vmem:[%s1 + $0x38] sm:$0xf]
  %v55 = vld [vmem:[%s1 + $0x3c] sm:$0xf]
  %v56 = vld [vmem:[%s1 + $0x40] sm:$0xf]
  %v57 = vld [vmem:[%s1 + $0x44] sm:$0xf]
  %v58 = vld [vmem:[%s1 + $0x48] sm:$0x7]
  %v59 = vld [vmem:[%s2] sm:$0x1]
  %v61 = vlaneseq
  %v62 = vshrl.u32 %v61, 7
  %v63 = vsub.s32 0, %v62
  %v64 = vrot.slane %v59, %v63
  %v91 = vunpack.c.l.b16 %v15
  %v92 = vunpack.c.h.b16 %v15
  %v93 = vunpack.c.l.b16 %v16
  %v94 = vunpack.c.h.b16 %v16
  %v95 = vunpack.c.l.b16 %v17
  %v96 = vunpack.c.h.b16 %v17
  %v97 = vunpack.c.l.b16 %v18
  %v98 = vunpack.c.h.b16 %v18
  %v99 = vunpack.c.l.b16 %v19
  %v100 = vunpack.c.h.b16 %v19
  %v101 = vunpack.c.l.b16 %v20
  %v102 = vunpack.c.h.b16 %v20
  %v103 = vunpack.c.l.b16 %v21
  %v104 = vunpack.c.h.b16 %v21
  %v105 = vunpack.c.l.b16 %v22
  %v106 = vunpack.c.h.b16 %v22
  %v107 = vunpack.c.l.b16 %v23
  %v108 = vunpack.c.h.b16 %v23
  %v109 = vunpack.c.l.b16 %v24
  %v110 = vunpack.c.h.b16 %v24
  %v111 = vunpack.c.l.b16 %v25
  %v112 = vunpack.c.h.b16 %v25
  %v113 = vunpack.c.l.b16 %v26
  %v114 = vunpack.c.h.b16 %v26
  %v115 = vunpack.c.l.b16 %v27
  %v116 = vunpack.c.h.b16 %v27
  %v117 = vunpack.c.l.b16 %v28
  %v118 = vunpack.c.h.b16 %v28
  %v119 = vunpack.c.l.b16 %v29
  %v120 = vunpack.c.h.b16 %v29
  %v121 = vunpack.c.l.b16 %v30
  %v122 = vunpack.c.h.b16 %v30
  %v123 = vunpack.c.l.b16 %v31
  %v124 = vunpack.c.h.b16 %v31
  %v125 = vunpack.c.l.b16 %v32
  %v126 = vunpack.c.h.b16 %v32
  %v127 = vunpack.c.l.b16 %v33
  %v128 = vunpack.c.h.b16 %v33
  %v129 = vunpack.c.l.b16 %v34
  %v130 = vunpack.c.h.b16 %v34
  %v131 = vunpack.c.l.b16 %v35
  %v132 = vunpack.c.h.b16 %v35
  %v133 = vunpack.c.l.b16 %v36
  %v134 = vunpack.c.h.b16 %v36
  %v135 = vunpack.c.l.b16 %v37
  %v136 = vunpack.c.h.b16 %v37
  %v137 = vunpack.c.l.b16 %v38
  %v138 = vunpack.c.h.b16 %v38
  %v139 = vunpack.c.l.b16 %v39
  %v140 = vunpack.c.h.b16 %v39
  %v141 = vpack.c.b16 %v93, %v91
  %v142 = vpack.c.b16 %v94, %v92
  %v143 = vpack.c.b16 %v97, %v95
  %v144 = vpack.c.b16 %v98, %v96
  %v145 = vpack.c.b16 %v101, %v99
  %v146 = vpack.c.b16 %v102, %v100
  %v147 = vpack.c.b16 %v105, %v103
  %v148 = vpack.c.b16 %v106, %v104
  %v149 = vpack.c.b16 %v109, %v107
  %v150 = vpack.c.b16 %v110, %v108
  %v151 = vpack.c.b16 %v113, %v111
  %v152 = vpack.c.b16 %v114, %v112
  %v153 = vpack.c.b16 %v117, %v115
  %v154 = vpack.c.b16 %v118, %v116
  %v155 = vpack.c.b16 %v121, %v119
  %v156 = vpack.c.b16 %v122, %v120
  %v157 = vpack.c.b16 %v125, %v123
  %v158 = vpack.c.b16 %v126, %v124
  %v159 = vpack.c.b16 %v129, %v127
  %v160 = vpack.c.b16 %v130, %v128
  %v161 = vpack.c.b16 %v133, %v131
  %v162 = vpack.c.b16 %v134, %v132
  %v163 = vpack.c.b16 %v137, %v135
  %v164 = vpack.c.b16 %v138, %v136
  %v165 = vpack.c.b16 %v139, %v139
  %v166 = vpack.c.b16 %v140, %v140
  %v199 = vunpack.c.l.b16 %v40
  %v200 = vunpack.c.l.b16 %v41
  %v201 = vunpack.c.l.b16 %v42
  %v202 = vunpack.c.l.b16 %v43
  %v203 = vunpack.c.l.b16 %v44
  %v204 = vunpack.c.l.b16 %v45
  %v205 = vunpack.c.l.b16 %v46
  %v206 = vunpack.c.l.b16 %v47
  %v207 = vunpack.c.l.b16 %v48
  %v208 = vunpack.c.l.b16 %v49
  %v209 = vunpack.c.l.b16 %v50
  %v210 = vunpack.c.l.b16 %v51
  %v211 = vunpack.c.l.b16 %v52
  %v212 = vunpack.c.l.b16 %v53
  %v213 = vunpack.c.l.b16 %v54
  %v214 = vunpack.c.l.b16 %v55
  %v215 = vunpack.c.l.b16 %v56
  %v216 = vunpack.c.l.b16 %v57
  %v217 = vunpack.c.l.b16 %v58
  %v218 = vpack.c.b16 %v200, %v199
  %v219 = vpack.c.b16 %v202, %v201
  %v220 = vpack.c.b16 %v204, %v203
  %v221 = vpack.c.b16 %v206, %v205
  %v222 = vpack.c.b16 %v208, %v207
  %v223 = vpack.c.b16 %v210, %v209
  %v224 = vpack.c.b16 %v212, %v211
  %v225 = vpack.c.b16 %v214, %v213
  %v226 = vpack.c.b16 %v216, %v215
  %v227 = vpack.c.b16 %v217, %v217
  %vm237 = vcmask 179200
  %v239 = vsel %vm237, %v142, 0
  %v242 = vsel %vm237, %v144, 0
  %v245 = vsel %vm237, %v146, 0
  %v248 = vsel %vm237, %v148, 0
  %v251 = vsel %vm237, %v150, 0
  %v254 = vsel %vm237, %v152, 0
  %v257 = vsel %vm237, %v154, 0
  %v260 = vsel %vm237, %v156, 0
  %v263 = vsel %vm237, %v158, 0
  %v266 = vsel %vm237, %v160, 0
  %v269 = vsel %vm237, %v162, 0
  %v272 = vsel %vm237, %v164, 0
  %v275 = vsel %vm237, %v166, 0
  %vm277 = vcmask 1042432
  %v279 = vsel %vm277, %v227, 0
  %281 = vmatprep.subr.bf16.mxu0 0
  %282 = vmatpush1.bf16.msra.mxu0 %v218
  %283 = vmatprep.subr.bf16.mxu0 0
  %284 = vmatpush1.bf16.msra.mxu0 %v219
  %285 = vmatprep.subr.bf16.mxu0 0
  %286 = vmatpush1.bf16.msra.mxu0 %v220
  %287 = vmatprep.subr.bf16.mxu0 0
  %288 = vmatpush1.bf16.msra.mxu0 %v221
  %289 = vmatprep.subr.bf16.mxu0 0
  %290 = vmatpush1.bf16.msra.mxu0 %v222
  %291 = vmatprep.subr.bf16.mxu0 0
  %292 = vmatpush1.bf16.msra.mxu0 %v223
  %293 = vmatprep.subr.bf16.mxu0 0
  %294 = vmatpush1.bf16.msra.mxu0 %v224
  %295 = vmatprep.subr.bf16.mxu0 0
  %296 = vmatpush1.bf16.msra.mxu0 %v225
  %297 = vmatprep.subr.bf16.mxu0 0
  %298 = vmatpush1.bf16.msra.mxu0 %v226
  %299 = vmatprep.subr.bf16.mxu0 0
  %300 = vmatpush1.bf16.msra.mxu0 %v279
  %301 = vmatprep.subr.bf16.mxu0 0
  %302 = vmatpush1.bf16.msra.mxu0 0
  %303 = vmatprep.subr.bf16.mxu0 0
  %304 = vmatpush1.bf16.msra.mxu0 0
  %305 = vmatprep.subr.bf16.mxu0 0
  %306 = vmatpush1.bf16.msra.mxu0 0
  %307 = vmatprep.subr.bf16.mxu0 0
  %308 = vmatpush1.bf16.msra.mxu0 0
  %309 = vmatprep.subr.bf16.mxu0 0
  %310 = vmatpush1.bf16.msra.mxu0 0
  %311 = vmatprep.subr.bf16.mxu0 0
  %312 = vmatpush1.bf16.msra.mxu0 0
  %313 = vmatprep.mubr.bf16.mxu0 %v239
  %314 = vmatmul.mubr.bf16.gmra.mrb[0].mxu0 %v141
  %v315 = vpop.f32.mrb[0].mxu0
  %v316 = vadd.f32 %v64, %v315
  %v317 = vpop.f32.mrb[0].mxu0
  %v318 = vpop.f32.mrb[0].mxu0
  %v319 = vadd.f32 %v64, %v318
  %v320 = vpop.f32.mrb[0].mxu0
  %321 = vmatprep.mubr.bf16.mxu0 %v242
  %322 = vmatmul.mubr.bf16.gmra.mrb[0].mxu0 %v143
  %v323 = vpop.f32.mrb[0].mxu0
  %v324 = vadd.f32 %v64, %v323
  %v325 = vpop.f32.mrb[0].mxu0
  %v326 = vpop.f32.mrb[0].mxu0
  %v327 = vadd.f32 %v64, %v326
  %v328 = vpop.f32.mrb[0].mxu0
  %329 = vmatprep.mubr.bf16.mxu0 %v245
  %330 = vmatmul.mubr.bf16.gmra.mrb[0].mxu0 %v145
  %v331 = vpop.f32.mrb[0].mxu0
  %v332 = vadd.f32 %v64, %v331
  %v333 = vpop.f32.mrb[0].mxu0
  %v334 = vpop.f32.mrb[0].mxu0
  %v335 = vadd.f32 %v64, %v334
  %v336 = vpop.f32.mrb[0].mxu0
  %337 = vmatprep.mubr.bf16.mxu0 %v248
  %338 = vmatmul.mubr.bf16.gmra.mrb[0].mxu0 %v147
  %v339 = vpop.f32.mrb[0].mxu0
  %v340 = vadd.f32 %v64, %v339
  %v341 = vpop.f32.mrb[0].mxu0
  %v342 = vpop.f32.mrb[0].mxu0
  %v343 = vadd.f32 %v64, %v342
  %v344 = vpop.f32.mrb[0].mxu0
  %345 = vmatprep.mubr.bf16.mxu0 %v251
  %346 = vmatmul.mubr.bf16.gmra.mrb[0].mxu0 %v149
  %v347 = vpop.f32.mrb[0].mxu0
  %v348 = vadd.f32 %v64, %v347
  %v349 = vpop.f32.mrb[0].mxu0
  %v350 = vpop.f32.mrb[0].mxu0
  %v351 = vadd.f32 %v64, %v350
  %v352 = vpop.f32.mrb[0].mxu0
  %353 = vmatprep.mubr.bf16.mxu0 %v254
  %354 = vmatmul.mubr.bf16.gmra.mrb[0].mxu0 %v151
  %v355 = vpop.f32.mrb[0].mxu0
  %v356 = vadd.f32 %v64, %v355
  %v357 = vpop.f32.mrb[0].mxu0
  %v358 = vpop.f32.mrb[0].mxu0
  %v359 = vadd.f32 %v64, %v358
  %v360 = vpop.f32.mrb[0].mxu0
  %361 = vmatprep.mubr.bf16.mxu0 %v257
  %362 = vmatmul.mubr.bf16.gmra.mrb[0].mxu0 %v153
  %v363 = vpop.f32.mrb[0].mxu0
  %v364 = vadd.f32 %v64, %v363
  %v365 = vpop.f32.mrb[0].mxu0
  %v366 = vpop.f32.mrb[0].mxu0
  %v367 = vadd.f32 %v64, %v366
  %v368 = vpop.f32.mrb[0].mxu0
  %369 = vmatprep.mubr.bf16.mxu0 %v260
  %370 = vmatmul.mubr.bf16.gmra.mrb[0].mxu0 %v155
  %v371 = vpop.f32.mrb[0].mxu0
  %v372 = vadd.f32 %v64, %v371
  %v373 = vpop.f32.mrb[0].mxu0
  %v374 = vpop.f32.mrb[0].mxu0
  %v375 = vadd.f32 %v64, %v374
  %v376 = vpop.f32.mrb[0].mxu0
  %377 = vmatprep.mubr.bf16.mxu0 %v263
  %378 = vmatmul.mubr.bf16.gmra.mrb[0].mxu0 %v157
  %v379 = vpop.f32.mrb[0].mxu0
  %v380 = vadd.f32 %v64, %v379
  %v381 = vpop.f32.mrb[0].mxu0
  %v382 = vpop.f32.mrb[0].mxu0
  %v383 = vadd.f32 %v64, %v382
  %v384 = vpop.f32.mrb[0].mxu0
  %385 = vmatprep.mubr.bf16.mxu0 %v266
  %386 = vmatmul.mubr.bf16.gmra.mrb[0].mxu0 %v159
  %v387 = vpop.f32.mrb[0].mxu0
  %v388 = vadd.f32 %v64, %v387
  %v389 = vpop.f32.mrb[0].mxu0
  %v390 = vpop.f32.mrb[0].mxu0
  %v391 = vadd.f32 %v64, %v390
  %v392 = vpop.f32.mrb[0].mxu0
  %393 = vmatprep.mubr.bf16.mxu0 %v269
  %394 = vmatmul.mubr.bf16.gmra.mrb[0].mxu0 %v161
  %v395 = vpop.f32.mrb[0].mxu0
  %v396 = vadd.f32 %v64, %v395
  %v397 = vpop.f32.mrb[0].mxu0
  %v398 = vpop.f32.mrb[0].mxu0
  %v399 = vadd.f32 %v64, %v398
  %v400 = vpop.f32.mrb[0].mxu0
  %401 = vmatprep.mubr.bf16.mxu0 %v272
  %402 = vmatmul.mubr.bf16.gmra.mrb[0].mxu0 %v163
  %v403 = vpop.f32.mrb[0].mxu0
  %v404 = vadd.f32 %v64, %v403
  %v405 = vpop.f32.mrb[0].mxu0
  %v406 = vpop.f32.mrb[0].mxu0
  %v407 = vadd.f32 %v64, %v406
  %v408 = vpop.f32.mrb[0].mxu0
  %409 = vmatprep.mubr.bf16.mxu0 %v275
  %410 = vmatmul.mubr.bf16.gmra.mrb[0].mxu0 %v165
  %v411 = vpop.f32.mrb[0].mxu0
  %v412 = vadd.f32 %v64, %v411
  %v413 = vpop.f32.mrb[0].mxu0
  %v414 = vpop.f32.mrb[0].mxu0
  %v415 = vpop.f32.mrb[0].mxu0
  %416 = vdwg.mxu0
  %v417 = vmax.f32 %v316, 0.0
  %v418 = vmax.f32 %v319, 0.0
  %v419 = vmax.f32 %v324, 0.0
  %v420 = vmax.f32 %v327, 0.0
  %v421 = vmax.f32 %v332, 0.0
  %v422 = vmax.f32 %v335, 0.0
  %v423 = vmax.f32 %v340, 0.0
  %v424 = vmax.f32 %v343, 0.0
  %v425 = vmax.f32 %v348, 0.0
  %v426 = vmax.f32 %v351, 0.0
  %v427 = vmax.f32 %v356, 0.0
  %v428 = vmax.f32 %v359, 0.0
  %v429 = vmax.f32 %v364, 0.0
  %v430 = vmax.f32 %v367, 0.0
  %v431 = vmax.f32 %v372, 0.0
  %v432 = vmax.f32 %v375, 0.0
  %v433 = vmax.f32 %v380, 0.0
  %v434 = vmax.f32 %v383, 0.0
  %v435 = vmax.f32 %v388, 0.0
  %v436 = vmax.f32 %v391, 0.0
  %v437 = vmax.f32 %v396, 0.0
  %v438 = vmax.f32 %v399, 0.0
  %v439 = vmax.f32 %v404, 0.0
  %v440 = vmax.f32 %v407, 0.0
  %v441 = vmax.f32 %v412, 0.0
  %v442 = vpack.c.bf16 %v418, %v417
  %v443 = vpack.c.bf16 %v420, %v419
  %v444 = vpack.c.bf16 %v422, %v421
  %v445 = vpack.c.bf16 %v424, %v423
  %v446 = vpack.c.bf16 %v426, %v425
  %v447 = vpack.c.bf16 %v428, %v427
  %v448 = vpack.c.bf16 %v430, %v429
  %v449 = vpack.c.bf16 %v432, %v431
  %v450 = vpack.c.bf16 %v434, %v433
  %v451 = vpack.c.bf16 %v436, %v435
  %v452 = vpack.c.bf16 %v438, %v437
  %v453 = vpack.c.bf16 %v440, %v439
  %v454 = vpack.c.bf16 %v441, %v441
  %v468 = vunpack.c.l.b16 %v442
  %v469 = vunpack.c.h.b16 %v442
  %v470 = vunpack.c.l.b16 %v443
  %v471 = vunpack.c.h.b16 %v443
  %v472 = vunpack.c.l.b16 %v444
  %v473 = vunpack.c.h.b16 %v444
  %v474 = vunpack.c.l.b16 %v445
  %v475 = vunpack.c.h.b16 %v445
  %v476 = vunpack.c.l.b16 %v446
  %v477 = vunpack.c.h.b16 %v446
  %v478 = vunpack.c.l.b16 %v447
  %v479 = vunpack.c.h.b16 %v447
  %v480 = vunpack.c.l.b16 %v448
  %v481 = vunpack.c.h.b16 %v448
  %v482 = vunpack.c.l.b16 %v449
  %v483 = vunpack.c.h.b16 %v449
  %v484 = vunpack.c.l.b16 %v450
  %v485 = vunpack.c.h.b16 %v450
  %v486 = vunpack.c.l.b16 %v451
  %v487 = vunpack.c.h.b16 %v451
  %v488 = vunpack.c.l.b16 %v452
  %v489 = vunpack.c.h.b16 %v452
  %v490 = vunpack.c.l.b16 %v453
  %v491 = vunpack.c.h.b16 %v453
  %v492 = vunpack.c.l.b16 %v454
  %v493 = vpack.c.b16 %v468, %v468
  %v494 = vpack.c.b16 %v469, %v469
  %v495 = vpack.c.b16 %v470, %v470
  %v496 = vpack.c.b16 %v471, %v471
  %v497 = vpack.c.b16 %v472, %v472
  %v498 = vpack.c.b16 %v473, %v473
  %v499 = vpack.c.b16 %v474, %v474
  %v500 = vpack.c.b16 %v475, %v475
  %v501 = vpack.c.b16 %v476, %v476
  %v502 = vpack.c.b16 %v477, %v477
  %v503 = vpack.c.b16 %v478, %v478
  %v504 = vpack.c.b16 %v479, %v479
  %v505 = vpack.c.b16 %v480, %v480
  %v506 = vpack.c.b16 %v481, %v481
  %v507 = vpack.c.b16 %v482, %v482
  %v508 = vpack.c.b16 %v483, %v483
  %v509 = vpack.c.b16 %v484, %v484
  %v510 = vpack.c.b16 %v485, %v485
  %v511 = vpack.c.b16 %v486, %v486
  %v512 = vpack.c.b16 %v487, %v487
  %v513 = vpack.c.b16 %v488, %v488
  %v514 = vpack.c.b16 %v489, %v489
  %v515 = vpack.c.b16 %v490, %v490
  %v516 = vpack.c.b16 %v491, %v491
  %v517 = vpack.c.b16 %v492, %v492
  %543 = vst [vmem:[%s3] sm:$0xf] %v493
  %544 = vst [vmem:[%s3 + $0x4] sm:$0xf] %v494
  %545 = vst [vmem:[%s3 + $0x8] sm:$0xf] %v495
  %546 = vst [vmem:[%s3 + $0xc] sm:$0xf] %v496
  %547 = vst [vmem:[%s3 + $0x10] sm:$0xf] %v497
  %548 = vst [vmem:[%s3 + $0x14] sm:$0xf] %v498
  %549 = vst [vmem:[%s3 + $0x18] sm:$0xf] %v499
  %550 = vst [vmem:[%s3 + $0x1c] sm:$0xf] %v500
  %551 = vst [vmem:[%s3 + $0x20] sm:$0xf] %v501
  %552 = vst [vmem:[%s3 + $0x24] sm:$0xf] %v502
  %553 = vst [vmem:[%s3 + $0x28] sm:$0xf] %v503
  %554 = vst [vmem:[%s3 + $0x2c] sm:$0xf] %v504
  %555 = vst [vmem:[%s3 + $0x30] sm:$0xf] %v505
  %556 = vst [vmem:[%s3 + $0x34] sm:$0xf] %v506
  %557 = vst [vmem:[%s3 + $0x38] sm:$0xf] %v507
  %558 = vst [vmem:[%s3 + $0x3c] sm:$0xf] %v508
  %559 = vst [vmem:[%s3 + $0x40] sm:$0xf] %v509
  %560 = vst [vmem:[%s3 + $0x44] sm:$0xf] %v510
  %561 = vst [vmem:[%s3 + $0x48] sm:$0xf] %v511
  %562 = vst [vmem:[%s3 + $0x4c] sm:$0xf] %v512
  %563 = vst [vmem:[%s3 + $0x50] sm:$0xf] %v513
  %564 = vst [vmem:[%s3 + $0x54] sm:$0xf] %v514
  %565 = vst [vmem:[%s3 + $0x58] sm:$0xf] %v515
  %566 = vst [vmem:[%s3 + $0x5c] sm:$0xf] %v516
  %567 = vst [vmem:[%s3 + $0x60] sm:$0xf] %v517
  // Predicated region
  $region14: #{net_forward.4} parent=0 // pred_check
    _
  $region15: #{net_forward.4} parent=0 // pred_check_branch
    %569 = sbr.rel (0) target = $region17
  $region16: #{net_forward.4} parent=0 // pred_region
    _
  $region17: #{net_forward.4} parent=0 // pred_fallthru
    _
  // Predicated region
  $region18: #{net_forward.4} parent=0 // pred_check
    _
  $region19: #{net_forward.4} parent=0 // pred_check_branch
    %571 = sbr.rel (0) target = $region21
  $region20: #{net_forward.4} parent=0 // pred_region
    _
  $region21: #{net_forward.4} parent=0 // pred_fallthru
    _

// kernel: net_forward.5
$region0: #{net_forward.5}
  #allocation0 [shape = 'u32[]', space=smem, size = 0x4, offset = 0x4, fixed_abs, tag = 'smem constant byte address 0x4 - core index']
  #allocation1 [shape = 'u32[144,128]{1,0:T(1,128)}', space=vmem, size = 0x12000, scoped, tag = 'internal scratch']
  %s0 = inlined_call_operand.vmem [shape: bf16[2,400], index: 0, kind: input, shape index: {}]
  %s1 = inlined_call_operand.vmem [shape: bf16[400,128], index: 1, kind: input, shape index: {}]
  %s2 = inlined_call_operand.vmem [shape: f32[1,128], index: 2, kind: input, shape index: {}]
  %s3 = inlined_call_operand.vmem [shape: bf16[128,128], index: 3, kind: input, shape index: {}]
  %s4 = inlined_call_operand.vmem [shape: f32[1,128], index: 4, kind: input, shape index: {}]
  %s5 = inlined_call_operand.vmem [shape: bf16[128,128], index: 5, kind: input, shape index: {}]
  %s6 = inlined_call_operand.vmem [shape: f32[1,128], index: 6, kind: input, shape index: {}]
  %s7 = inlined_call_operand.vmem [shape: f32[2,128], index: 7, kind: output, shape index: {}]
  %s8 = sld [smem:[#allocation0]]
  $region38: #{net_forward.5} parent=0
    _
  %s10 = ssub.s32 1, %s8
  %s11 = scalar_select 0, %s10, %s8
  // Predicated region
  $region2: #{net_forward.5} parent=0 // pred_check
    _
  $region3: #{net_forward.5} parent=0 // pred_check_branch
    %13 = sbr.rel (0) target = $region5
  $region4: #{net_forward.5} parent=0 // pred_region
    _
  $region5: #{net_forward.5} parent=0 // pred_fallthru
    _
  // Predicated region
  $region6: #{net_forward.5} parent=0 // pred_check
    _
  $region7: #{net_forward.5} parent=0 // pred_check_branch
    %15 = sbr.rel (0) target = $region9
  $region8: #{net_forward.5} parent=0 // pred_region
    _
  $region9: #{net_forward.5} parent=0 // pred_fallthru
    _
  // Predicated region
  $region10: #{net_forward.5} parent=0 // pred_check
    _
  $region11: #{net_forward.5} parent=0 // pred_check_branch
    %17 = sbr.rel (0) target = $region13
  $region12: #{net_forward.5} parent=0 // pred_region
    _
  $region13: #{net_forward.5} parent=0 // pred_fallthru
    _
  // Predicated region
  $region14: #{net_forward.5} parent=0 // pred_check
    _
  $region15: #{net_forward.5} parent=0 // pred_check_branch
    %19 = sbr.rel (0) target = $region17
  $region16: #{net_forward.5} parent=0 // pred_region
    _
  $region17: #{net_forward.5} parent=0 // pred_fallthru
    _
  // Predicated region
  $region18: #{net_forward.5} parent=0 // pred_check
    _
  $region19: #{net_forward.5} parent=0 // pred_check_branch
    %21 = sbr.rel (0) target = $region21
  $region20: #{net_forward.5} parent=0 // pred_region
    _
  $region21: #{net_forward.5} parent=0 // pred_fallthru
    _
  // Predicated region
  $region22: #{net_forward.5} parent=0 // pred_check
    _
  $region23: #{net_forward.5} parent=0 // pred_check_branch
    %23 = sbr.rel (0) target = $region25
  $region24: #{net_forward.5} parent=0 // pred_region
    _
  $region25: #{net_forward.5} parent=0 // pred_fallthru
    _
  // Predicated region
  $region26: #{net_forward.5} parent=0 // pred_check
    _
  $region27: #{net_forward.5} parent=0 // pred_check_branch
    %25 = sbr.rel (0) target = $region29
  $region28: #{net_forward.5} parent=0 // pred_region
    _
  $region29: #{net_forward.5} parent=0 // pred_fallthru
    _
  %v27 = vld [vmem:[%s0] sm:$0xf]
  %v28 = vld [vmem:[%s1] sm:$0xf]
  %v29 = vld [vmem:[%s1 + $0x4] sm:$0xf]
  %v30 = vld [vmem:[%s1 + $0x8] sm:$0xf]
  %v31 = vld [vmem:[%s1 + $0xc] sm:$0xf]
  %v32 = vld [vmem:[%s1 + $0x10] sm:$0xf]
  %v33 = vld [vmem:[%s1 + $0x14] sm:$0xf]
  %v34 = vld [vmem:[%s1 + $0x18] sm:$0xf]
  %v35 = vld [vmem:[%s1 + $0x1c] sm:$0xf]
  %v36 = vld [vmem:[%s1 + $0x20] sm:$0xf]
  %v37 = vld [vmem:[%s1 + $0x24] sm:$0xf]
  %v38 = vld [vmem:[%s1 + $0x28] sm:$0xf]
  %v39 = vld [vmem:[%s1 + $0x2c] sm:$0xf]
  %v40 = vld [vmem:[%s1 + $0x30] sm:$0xf]
  %v41 = vld [vmem:[%s1 + $0x34] sm:$0xf]
  %v42 = vld [vmem:[%s1 + $0x38] sm:$0xf]
  %v43 = vld [vmem:[%s1 + $0x3c] sm:$0xf]
  %v44 = vld [vmem:[%s1 + $0x40] sm:$0xf]
  %v45 = vld [vmem:[%s1 + $0x44] sm:$0xf]
  %v46 = vld [vmem:[%s1 + $0x48] sm:$0xf]
  %v47 = vld [vmem:[%s1 + $0x4c] sm:$0xf]
  %v48 = vld [vmem:[%s1 + $0x50] sm:$0xf]
  %v49 = vld [vmem:[%s1 + $0x54] sm:$0xf]
  %v50 = vld [vmem:[%s1 + $0x58] sm:$0xf]
  %v51 = vld [vmem:[%s1 + $0x5c] sm:$0xf]
  %v52 = vld [vmem:[%s1 + $0x60] sm:$0xf]
  %v53 = vld [vmem:[%s1 + $0x64] sm:$0xf]
  %v54 = vld [vmem:[%s1 + $0x68] sm:$0xf]
  %v55 = vld [vmem:[%s1 + $0x6c] sm:$0xf]
  %v56 = vld [vmem:[%s1 + $0x70] sm:$0xf]
  %v57 = vld [vmem:[%s1 + $0x74] sm:$0xf]
  %v58 = vld [vmem:[%s1 + $0x78] sm:$0xf]
  %v59 = vld [vmem:[%s1 + $0x7c] sm:$0xf]
  %v60 = vld [vmem:[%s1 + $0x80] sm:$0xf]
  %v61 = vld [vmem:[%s1 + $0x84] sm:$0xf]
  %v62 = vld [vmem:[%s1 + $0x88] sm:$0xf]
  %v63 = vld [vmem:[%s1 + $0x8c] sm:$0xf]
  %v64 = vld [vmem:[%s1 + $0x90] sm:$0xf]
  %v65 = vld [vmem:[%s1 + $0x94] sm:$0xf]
  %v66 = vld [vmem:[%s1 + $0x98] sm:$0xf]
  %v67 = vld [vmem:[%s1 + $0x9c] sm:$0xf]
  %v68 = vld [vmem:[%s1 + $0xa0] sm:$0xf]
  %v69 = vld [vmem:[%s1 + $0xa4] sm:$0xf]
  %v70 = vld [vmem:[%s1 + $0xa8] sm:$0xf]
  %v71 = vld [vmem:[%s1 + $0xac] sm:$0xf]
  %v72 = vld [vmem:[%s1 + $0xb0] sm:$0xf]
  %v73 = vld [vmem:[%s1 + $0xb4] sm:$0xf]
  %v74 = vld [vmem:[%s1 + $0xb8] sm:$0xf]
  %v75 = vld [vmem:[%s1 + $0xbc] sm:$0xf]
  %v76 = vld [vmem:[%s1 + $0xc0] sm:$0xf]
  %v77 = vld [vmem:[%s1 + $0xc4] sm:$0xf]
  %v78 = vld [vmem:[%s2] sm:$0x1]
  %v80 = vlaneseq
  %v81 = vshrl.u32 %v80, 7
  %v82 = vsub.s32 0, %v81
  %v83 = vrot.slane %v78, %v82
  %v87 = vunpack.c.l.s4 1966171168
  %v88 = vunpack.c.0.s8 %v87
  %v89 = vlaneseq
  %v90 = vshrl.u32 %v89, 7
  %v91 = vsub.s32 %v88, %v90
  %v92 = vrot.slane %v27, %v91
  %v93 = vcombine.high %v92, %v92
  %v95 = vunpack.c.l.s4 1966171168
  %v96 = vunpack.c.0.s8 %v95
  %v97 = vlaneseq
  %v98 = vshrl.u32 %v97, 7
  %v99 = vsub.s32 %v96, %v98
  %v100 = vrot.slane %v92, %v99
  %v102 = vunpack.c.l.s4 1966171168
  %v103 = vunpack.c.0.s8 %v102
  %v104 = vlaneseq
  %v105 = vshrl.u32 %v104, 7
  %v106 = vsub.s32 %v103, %v105
  %v107 = vrot.slane %v93, %v106
  %v108 = vcombine.high %v100, %v100
  %v109 = vcombine.high %v107, %v107
  %v163 = vunpack.c.l.b16 %v28
  %v164 = vunpack.c.l.b16 %v29
  %v165 = vunpack.c.l.b16 %v30
  %v166 = vunpack.c.l.b16 %v31
  %v167 = vunpack.c.l.b16 %v32
  %v168 = vunpack.c.l.b16 %v33
  %v169 = vunpack.c.l.b16 %v34
  %v170 = vunpack.c.l.b16 %v35
  %v171 = vunpack.c.l.b16 %v36
  %v172 = vunpack.c.l.b16 %v37
  %v173 = vunpack.c.l.b16 %v38
  %v174 = vunpack.c.l.b16 %v39
  %v175 = vunpack.c.l.b16 %v40
  %v176 = vunpack.c.l.b16 %v41
  %v177 = vunpack.c.l.b16 %v42
  %v178 = vunpack.c.l.b16 %v43
  %v179 = vunpack.c.l.b16 %v44
  %v180 = vunpack.c.l.b16 %v45
  %v181 = vunpack.c.l.b16 %v46
  %v182 = vunpack.c.l.b16 %v47
  %v183 = vunpack.c.l.b16 %v48
  %v184 = vunpack.c.l.b16 %v49
  %v185 = vunpack.c.l.b16 %v50
  %v186 = vunpack.c.l.b16 %v51
  %v187 = vunpack.c.l.b16 %v52
  %v188 = vunpack.c.l.b16 %v53
  %v189 = vunpack.c.l.b16 %v54
  %v190 = vunpack.c.l.b16 %v55
  %v191 = vunpack.c.l.b16 %v56
  %v192 = vunpack.c.l.b16 %v57
  %v193 = vunpack.c.l.b16 %v58
  %v194 = vunpack.c.l.b16 %v59
  %v195 = vunpack.c.l.b16 %v60
  %v196 = vunpack.c.l.b16 %v61
  %v197 = vunpack.c.l.b16 %v62
  %v198 = vunpack.c.l.b16 %v63
  %v199 = vunpack.c.l.b16 %v64
  %v200 = vunpack.c.l.b16 %v65
  %v201 = vunpack.c.l.b16 %v66
  %v202 = vunpack.c.l.b16 %v67
  %v203 = vunpack.c.l.b16 %v68
  %v204 = vunpack.c.l.b16 %v69
  %v205 = vunpack.c.l.b16 %v70
  %v206 = vunpack.c.l.b16 %v71
  %v207 = vunpack.c.l.b16 %v72
  %v208 = vunpack.c.l.b16 %v73
  %v209 = vunpack.c.l.b16 %v74
  %v210 = vunpack.c.l.b16 %v75
  %v211 = vunpack.c.l.b16 %v76
  %v212 = vunpack.c.l.b16 %v77
  %v213 = vpack.c.b16 %v164, %v163
  %v214 = vpack.c.b16 %v166, %v165
  %v215 = vpack.c.b16 %v168, %v167
  %v216 = vpack.c.b16 %v170, %v169
  %v217 = vpack.c.b16 %v172, %v171
  %v218 = vpack.c.b16 %v174, %v173
  %v219 = vpack.c.b16 %v176, %v175
  %v220 = vpack.c.b16 %v178, %v177
  %v221 = vpack.c.b16 %v180, %v179
  %v222 = vpack.c.b16 %v182, %v181
  %v223 = vpack.c.b16 %v184, %v183
  %v224 = vpack.c.b16 %v186, %v185
  %v225 = vpack.c.b16 %v188, %v187
  %v226 = vpack.c.b16 %v190, %v189
  %v227 = vpack.c.b16 %v192, %v191
  %v228 = vpack.c.b16 %v194, %v193
  %v229 = vpack.c.b16 %v196, %v195
  %v230 = vpack.c.b16 %v198, %v197
  %v231 = vpack.c.b16 %v200, %v199
  %v232 = vpack.c.b16 %v202, %v201
  %v233 = vpack.c.b16 %v204, %v203
  %v234 = vpack.c.b16 %v206, %v205
  %v235 = vpack.c.b16 %v208, %v207
  %v236 = vpack.c.b16 %v210, %v209
  %v237 = vpack.c.b16 %v212, %v211
  %vm263 = vcmask 130048
  %v265 = vsel %vm263, %v109, 0
  %267 = vmatprep.subr.bf16.mxu0 0
  %268 = vmatpush1.bf16.msra.mxu0 %v213
  %269 = vmatprep.subr.bf16.mxu0 0
  %270 = vmatpush1.bf16.msra.mxu0 %v214
  %271 = vmatprep.subr.bf16.mxu0 0
  %272 = vmatpush1.bf16.msra.mxu0 %v215
  %273 = vmatprep.subr.bf16.mxu0 0
  %274 = vmatpush1.bf16.msra.mxu0 %v216
  %275 = vmatprep.subr.bf16.mxu0 0
  %276 = vmatpush1.bf16.msra.mxu0 %v217
  %277 = vmatprep.subr.bf16.mxu0 0
  %278 = vmatpush1.bf16.msra.mxu0 %v218
  %279 = vmatprep.subr.bf16.mxu0 0
  %280 = vmatpush1.bf16.msra.mxu0 %v219
  %281 = vmatprep.subr.bf16.mxu0 0
  %282 = vmatpush1.bf16.msra.mxu0 %v220
  %283 = vmatprep.subr.bf16.mxu0 0
  %284 = vmatpush1.bf16.msra.mxu0 %v221
  %285 = vmatprep.subr.bf16.mxu0 0
  %286 = vmatpush1.bf16.msra.mxu0 %v222
  %287 = vmatprep.subr.bf16.mxu0 0
  %288 = vmatpush1.bf16.msra.mxu0 %v223
  %289 = vmatprep.subr.bf16.mxu0 0
  %290 = vmatpush1.bf16.msra.mxu0 %v224
  %291 = vmatprep.subr.bf16.mxu0 0
  %292 = vmatpush1.bf16.msra.mxu0 %v225
  %293 = vmatprep.subr.bf16.mxu0 0
  %294 = vmatpush1.bf16.msra.mxu0 %v226
  %295 = vmatprep.subr.bf16.mxu0 0
  %296 = vmatpush1.bf16.msra.mxu0 %v227
  %297 = vmatprep.subr.bf16.mxu0 0
  %298 = vmatpush1.bf16.msra.mxu0 %v228
  %299 = vmatprep.mubr.bf16.mxu0 %v107
  %300 = vmatmul.mubr.bf16.gmra.mrb[0].mxu0 %v100
  %v301 = vpop.f32.mrb[0].mxu0
  %v302 = vadd.f32 %v83, %v301
  %v303 = vpop.f32.mrb[0].mxu0
  %v304 = vpop.f32.mrb[0].mxu0
  %v305 = vpop.f32.mrb[0].mxu0
  %306 = vdwg.mxu0
  %307 = vmatprep.subr.bf16.mxu0 0
  %308 = vmatpush1.bf16.msra.mxu0 %v229
  %309 = vmatprep.subr.bf16.mxu0 0
  %310 = vmatpush1.bf16.msra.mxu0 %v230
  %311 = vmatprep.subr.bf16.mxu0 0
  %312 = vmatpush1.bf16.msra.mxu0 %v231
  %313 = vmatprep.subr.bf16.mxu0 0
  %314 = vmatpush1.bf16.msra.mxu0 %v232
  %315 = vmatprep.subr.bf16.mxu0 0
  %316 = vmatpush1.bf16.msra.mxu0 %v233
  %317 = vmatprep.subr.bf16.mxu0 0
  %318 = vmatpush1.bf16.msra.mxu0 %v234
  %319 = vmatprep.subr.bf16.mxu0 0
  %320 = vmatpush1.bf16.msra.mxu0 %v235
  %321 = vmatprep.subr.bf16.mxu0 0
  %322 = vmatpush1.bf16.msra.mxu0 %v236
  %323 = vmatprep.subr.bf16.mxu0 0
  %324 = vmatpush1.bf16.msra.mxu0 %v237
  %325 = vmatprep.subr.bf16.mxu0 0
  %326 = vmatpush1.bf16.msra.mxu0 0
  %327 = vmatprep.subr.bf16.mxu0 0
  %328 = vmatpush1.bf16.msra.mxu0 0
  %329 = vmatprep.subr.bf16.mxu0 0
  %330 = vmatpush1.bf16.msra.mxu0 0
  %331 = vmatprep.subr.bf16.mxu0 0
  %332 = vmatpush1.bf16.msra.mxu0 0
  %333 = vmatprep.subr.bf16.mxu0 0
  %334 = vmatpush1.bf16.msra.mxu0 0
  %335 = vmatprep.subr.bf16.mxu0 0
  %336 = vmatpush1.bf16.msra.mxu0 0
  %337 = vmatprep.subr.bf16.mxu0 0
  %338 = vmatpush1.bf16.msra.mxu0 0
  %339 = vmatprep.mubr.bf16.mxu0 %v265
  %340 = vmatmul.mubr.bf16.gmra.mrb[0].mxu0 %v108
  %v341 = vpop.f32.mrb[0].mxu0
  %v342 = vadd.f32 %v302, %v341
  %v343 = vpop.f32.mrb[0].mxu0
  %v344 = vpop.f32.mrb[0].mxu0
  %v345 = vpop.f32.mrb[0].mxu0
  %346 = vdwg.mxu0
  %v347 = vmax.f32 %v342, 0.0
  %v348 = vpack.c.bf16 %v347, %v347
  %v349 = vld [vmem:[%s3] sm:$0xf]
  %v350 = vld [vmem:[%s3 + $0x4] sm:$0xf]
  %v351 = vld [vmem:[%s3 + $0x8] sm:$0xf]
  %v352 = vld [vmem:[%s3 + $0xc] sm:$0xf]
  %v353 = vld [vmem:[%s3 + $0x10] sm:$0xf]
  %v354 = vld [vmem:[%s3 + $0x14] sm:$0xf]
  %v355 = vld [vmem:[%s3 + $0x18] sm:$0xf]
  %v356 = vld [vmem:[%s3 + $0x1c] sm:$0xf]
  %v357 = vld [vmem:[%s3 + $0x20] sm:$0xf]
  %v358 = vld [vmem:[%s3 + $0x24] sm:$0xf]
  %v359 = vld [vmem:[%s3 + $0x28] sm:$0xf]
  %v360 = vld [vmem:[%s3 + $0x2c] sm:$0xf]
  %v361 = vld [vmem:[%s3 + $0x30] sm:$0xf]
  %v362 = vld [vmem:[%s3 + $0x34] sm:$0xf]
  %v363 = vld [vmem:[%s3 + $0x38] sm:$0xf]
  %v364 = vld [vmem:[%s3 + $0x3c] sm:$0xf]
  %v365 = vld [vmem:[%s4] sm:$0x1]
  %v367 = vlaneseq
  %v368 = vshrl.u32 %v367, 7
  %v369 = vsub.s32 0, %v368
  %v370 = vrot.slane %v365, %v369
  %v388 = vunpack.c.l.b16 %v349
  %v389 = vunpack.c.l.b16 %v350
  %v390 = vunpack.c.l.b16 %v351
  %v391 = vunpack.c.l.b16 %v352
  %v392 = vunpack.c.l.b16 %v353
  %v393 = vunpack.c.l.b16 %v354
  %v394 = vunpack.c.l.b16 %v355
  %v395 = vunpack.c.l.b16 %v356
  %v396 = vunpack.c.l.b16 %v357
  %v397 = vunpack.c.l.b16 %v358
  %v398 = vunpack.c.l.b16 %v359
  %v399 = vunpack.c.l.b16 %v360
  %v400 = vunpack.c.l.b16 %v361
  %v401 = vunpack.c.l.b16 %v362
  %v402 = vunpack.c.l.b16 %v363
  %v403 = vunpack.c.l.b16 %v364
  %v404 = vpack.c.b16 %v389, %v388
  %v405 = vpack.c.b16 %v391, %v390
  %v406 = vpack.c.b16 %v393, %v392
  %v407 = vpack.c.b16 %v395, %v394
  %v408 = vpack.c.b16 %v397, %v396
  %v409 = vpack.c.b16 %v399, %v398
  %v410 = vpack.c.b16 %v401, %v400
  %v411 = vpack.c.b16 %v403, %v402
  %420 = vmatprep.subr.bf16.mxu0 0
  %421 = vmatpush1.bf16.msra.mxu0 %v404
  %422 = vmatprep.subr.bf16.mxu0 0
  %423 = vmatpush1.bf16.msra.mxu0 %v405
  %424 = vmatprep.subr.bf16.mxu0 0
  %425 = vmatpush1.bf16.msra.mxu0 %v406
  %426 = vmatprep.subr.bf16.mxu0 0
  %427 = vmatpush1.bf16.msra.mxu0 %v407
  %428 = vmatprep.subr.bf16.mxu0 0
  %429 = vmatpush1.bf16.msra.mxu0 %v408
  %430 = vmatprep.subr.bf16.mxu0 0
  %431 = vmatpush1.bf16.msra.mxu0 %v409
  %432 = vmatprep.subr.bf16.mxu0 0
  %433 = vmatpush1.bf16.msra.mxu0 %v410
  %434 = vmatprep.subr.bf16.mxu0 0
  %435 = vmatpush1.bf16.msra.mxu0 %v411
  %436 = vmatprep.subr.bf16.mxu0 0
  %437 = vmatpush1.bf16.msra.mxu0 0
  %438 = vmatprep.subr.bf16.mxu0 0
  %439 = vmatpush1.bf16.msra.mxu0 0
  %440 = vmatprep.subr.bf16.mxu0 0
  %441 = vmatpush1.bf16.msra.mxu0 0
  %442 = vmatprep.subr.bf16.mxu0 0
  %443 = vmatpush1.bf16.msra.mxu0 0
  %444 = vmatprep.subr.bf16.mxu0 0
  %445 = vmatpush1.bf16.msra.mxu0 0
  %446 = vmatprep.subr.bf16.mxu0 0
  %447 = vmatpush1.bf16.msra.mxu0 0
  %448 = vmatprep.subr.bf16.mxu0 0
  %449 = vmatpush1.bf16.msra.mxu0 0
  %450 = vmatprep.subr.bf16.mxu0 0
  %451 = vmatpush1.bf16.msra.mxu0 0
  %452 = vmatprep.mubr.bf16.mxu0 0
  %453 = vmatmul.mubr.bf16.gmra.mrb[0].mxu0 %v348
  %v454 = vpop.f32.mrb[0].mxu0
  %v455 = vadd.f32 %v370, %v454
  %v456 = vpop.f32.mrb[0].mxu0
  %v457 = vpop.f32.mrb[0].mxu0
  %v458 = vpop.f32.mrb[0].mxu0
  %459 = vdwg.mxu0
  %v460 = vmax.f32 %v455, 0.0
  %v461 = vpack.c.bf16 %v460, %v460
  %v462 = vld [vmem:[%s5] sm:$0xf]
  %v463 = vld [vmem:[%s5 + $0x4] sm:$0xf]
  %v464 = vld [vmem:[%s5 + $0x8] sm:$0xf]
  %v465 = vld [vmem:[%s5 + $0xc] sm:$0xf]
  %v466 = vld [vmem:[%s5 + $0x10] sm:$0xf]
  %v467 = vld [vmem:[%s5 + $0x14] sm:$0xf]
  %v468 = vld [vmem:[%s5 + $0x18] sm:$0xf]
  %v469 = vld [vmem:[%s5 + $0x1c] sm:$0xf]
  %v470 = vld [vmem:[%s5 + $0x20] sm:$0xf]
  %v471 = vld [vmem:[%s5 + $0x24] sm:$0xf]
  %v472 = vld [vmem:[%s5 + $0x28] sm:$0xf]
  %v473 = vld [vmem:[%s5 + $0x2c] sm:$0xf]
  %v474 = vld [vmem:[%s5 + $0x30] sm:$0xf]
  %v475 = vld [vmem:[%s5 + $0x34] sm:$0xf]
  %v476 = vld [vmem:[%s5 + $0x38] sm:$0xf]
  %v477 = vld [vmem:[%s5 + $0x3c] sm:$0xf]
  %v478 = vld [vmem:[%s6] sm:$0x1]
  %v480 = vlaneseq
  %v481 = vshrl.u32 %v480, 7
  %v482 = vsub.s32 0, %v481
  %v483 = vrot.slane %v478, %v482
  %v501 = vunpack.c.l.b16 %v462
  %v502 = vunpack.c.l.b16 %v463
  %v503 = vunpack.c.l.b16 %v464
  %v504 = vunpack.c.l.b16 %v465
  %v505 = vunpack.c.l.b16 %v466
  %v506 = vunpack.c.l.b16 %v467
  %v507 = vunpack.c.l.b16 %v468
  %v508 = vunpack.c.l.b16 %v469
  %v509 = vunpack.c.l.b16 %v470
  %v510 = vunpack.c.l.b16 %v471
  %v511 = vunpack.c.l.b16 %v472
  %v512 = vunpack.c.l.b16 %v473
  %v513 = vunpack.c.l.b16 %v474
  %v514 = vunpack.c.l.b16 %v475
  %v515 = vunpack.c.l.b16 %v476
  %v516 = vunpack.c.l.b16 %v477
  %v517 = vpack.c.b16 %v502, %v501
  %v518 = vpack.c.b16 %v504, %v503
  %v519 = vpack.c.b16 %v506, %v505
  %v520 = vpack.c.b16 %v508, %v507
  %v521 = vpack.c.b16 %v510, %v509
  %v522 = vpack.c.b16 %v512, %v511
  %v523 = vpack.c.b16 %v514, %v513
  %v524 = vpack.c.b16 %v516, %v515
  %533 = vmatprep.subr.bf16.mxu0 0
  %534 = vmatpush1.bf16.msra.mxu0 %v517
  %535 = vmatprep.subr.bf16.mxu0 0
  %536 = vmatpush1.bf16.msra.mxu0 %v518
  %537 = vmatprep.subr.bf16.mxu0 0
  %538 = vmatpush1.bf16.msra.mxu0 %v519
  %539 = vmatprep.subr.bf16.mxu0 0
  %540 = vmatpush1.bf16.msra.mxu0 %v520
  %541 = vmatprep.subr.bf16.mxu0 0
  %542 = vmatpush1.bf16.msra.mxu0 %v521
  %543 = vmatprep.subr.bf16.mxu0 0
  %544 = vmatpush1.bf16.msra.mxu0 %v522
  %545 = vmatprep.subr.bf16.mxu0 0
  %546 = vmatpush1.bf16.msra.mxu0 %v523
  %547 = vmatprep.subr.bf16.mxu0 0
  %548 = vmatpush1.bf16.msra.mxu0 %v524
  %549 = vmatprep.subr.bf16.mxu0 0
  %550 = vmatpush1.bf16.msra.mxu0 0
  %551 = vmatprep.subr.bf16.mxu0 0
  %552 = vmatpush1.bf16.msra.mxu0 0
  %553 = vmatprep.subr.bf16.mxu0 0
  %554 = vmatpush1.bf16.msra.mxu0 0
  %555 = vmatprep.subr.bf16.mxu0 0
  %556 = vmatpush1.bf16.msra.mxu0 0
  %557 = vmatprep.subr.bf16.mxu0 0
  %558 = vmatpush1.bf16.msra.mxu0 0
  %559 = vmatprep.subr.bf16.mxu0 0
  %560 = vmatpush1.bf16.msra.mxu0 0
  %561 = vmatprep.subr.bf16.mxu0 0
  %562 = vmatpush1.bf16.msra.mxu0 0
  %563 = vmatprep.subr.bf16.mxu0 0
  %564 = vmatpush1.bf16.msra.mxu0 0
  %565 = vmatprep.mubr.bf16.mxu0 0
  %566 = vmatmul.mubr.bf16.gmra.mrb[0].mxu0 %v461
  %v567 = vpop.f32.mrb[0].mxu0
  %v568 = vadd.f32 %v483, %v567
  %v569 = vpop.f32.mrb[0].mxu0
  %v570 = vpop.f32.mrb[0].mxu0
  %v571 = vpop.f32.mrb[0].mxu0
  %572 = vdwg.mxu0
  %573 = vst [vmem:[%s7] sm:$0x3] %v568
  // Predicated region
  $region30: #{net_forward.5} parent=0 // pred_check
    _
  $region31: #{net_forward.5} parent=0 // pred_check_branch
    %575 = sbr.rel (0) target = $region33
  $region32: #{net_forward.5} parent=0 // pred_region
    _
  $region33: #{net_forward.5} parent=0 // pred_fallthru
    _
  // Predicated region
  $region34: #{net_forward.5} parent=0 // pred_check
    _
  $region35: #{net_forward.5} parent=0 // pred_check_branch
    %577 = sbr.rel (0) target = $region37
  $region36: #{net_forward.5} parent=0 // pred_region
    _
  $region37: #{net_forward.5} parent=0 // pred_fallthru
    _

</llo_original>
